<compile_context>
chip_gen: v7x
topology: tpu7x:2x2x1
jax: 0.10.0
libtpu: 0.0.40
codegen_flags: <defaults>
</compile_context>

<pallas_src>
import math
import functools

import jax
import jax.numpy as jnp
from jax.experimental import pallas as pl
from jax.experimental.pallas import tpu as pltpu


_GELU_C = math.sqrt(2.0 / math.pi)


def _gelu(x):
    # tanh-approximate GELU (tanh lowers to the EUP slot).
    # TODO(synk): PyTorch nn.GELU() defaults to the exact erf form; the tanh
    # approximation is used here for portable Pallas lowering (max abs
    # deviation ~1e-3, applied identically in the reference).
    return 0.5 * x * (1.0 + jnp.tanh(_GELU_C * (x + 0.044715 * x * x * x)))


def e_encoder_kernel(x_ref, *refs, n_hidden):
    """Fused E_Encoder forward for one (tb, D_pad) batch tile.

    refs layout: [w, b, bn_scale, bn_shift] * n_hidden, w_final, b_final, o_ref
    """
    o_ref = refs[-1]
    wf_ref = refs[4 * n_hidden]
    bf_ref = refs[4 * n_hidden + 1]

    x = x_ref[...]                                         # (tb, D_pad) f32
    h = x
    for i in range(n_hidden):
        w_ref, b_ref, s_ref, t_ref = refs[4 * i: 4 * i + 4]
        y = jnp.dot(h, w_ref[...], preferred_element_type=jnp.float32)
        y = _gelu(y + b_ref[...])                          # Linear + GELU
        # Dropout is identity in eval mode; BatchNorm1d (eval) folded into
        # a per-channel scale/shift computed in the wrapper.
        y = y * s_ref[...] + t_ref[...]
        h = y if i == 0 else h + y                         # residual for i > 0

    out = jnp.dot(h, wf_ref[...], preferred_element_type=jnp.float32)
    o_ref[...] = _gelu(out + bf_ref[...]).astype(o_ref.dtype)


def e_encoder(x, block_params, w_final, b_final, *, tile_b=128):
    """block_params: list of (W (din, H), b (1, H), bn_scale (1, H), bn_shift (1, H))."""
    B, D_in = x.shape
    H = block_params[0][0].shape[1]
    O = w_final.shape[1]
    n_hidden = len(block_params)

    # Lane-dense padding: pad the input feature axis to a multiple of 128 and
    # zero-pad the matching rows of the first weight (mathematically a no-op).
    D_pad = ((D_in + 127) // 128) * 128
    if D_pad != D_in:
        x = jnp.pad(x, ((0, 0), (0, D_pad - D_in)))
        w0, b0, s0, t0 = block_params[0]
        w0 = jnp.pad(w0, ((0, D_pad - D_in), (0, 0)))
        block_params = [(w0, b0, s0, t0)] + list(block_params[1:])

    tb = min(tile_b, B)
    assert B % tb == 0, "batch must be divisible by the batch tile"
    grid = (B // tb,)

    flat_params = []
    in_specs = [pl.BlockSpec((tb, D_pad), lambda i: (i, 0))]        # x
    for (w, b, s, t) in block_params:
        for p in (w, b, s, t):
            flat_params.append(p)
            in_specs.append(pl.BlockSpec(p.shape, lambda i: (0, 0)))  # resident
    for p in (w_final, b_final):
        flat_params.append(p)
        in_specs.append(pl.BlockSpec(p.shape, lambda i: (0, 0)))

    matmul_flops = 2 * B * (D_pad * H + (n_hidden - 1) * H * H + H * O)
    param_bytes = sum(int(p.size) * p.dtype.itemsize for p in flat_params)
    cost = pl.CostEstimate(
        flops=matmul_flops,
        transcendentals=B * (n_hidden * H + O),
        bytes_accessed=x.size * x.dtype.itemsize + B * O * 4 + param_bytes,
    )

    kernel = functools.partial(e_encoder_kernel, n_hidden=n_hidden)
    return pl.pallas_call(
        kernel,
        out_shape=jax.ShapeDtypeStruct((B, O), x.dtype),
        grid_spec=pltpu.PrefetchScalarGridSpec(
            num_scalar_prefetch=0,
            grid=grid,
            in_specs=in_specs,
            out_specs=pl.BlockSpec((tb, O), lambda i: (i, 0)),
        ),
        compiler_params=pltpu.CompilerParams(
            dimension_semantics=("parallel",)),
        cost_estimate=cost,
    )(x, *flat_params)


def reference(x, block_params, w_final, b_final):
    """Pure-JAX reference mirroring the PyTorch eval-mode forward."""
    hp = jax.lax.Precision.HIGHEST
    h = x
    for i, (w, b, s, t) in enumerate(block_params):
        y = _gelu(jnp.dot(h, w, precision=hp) + b)
        y = y * s + t
        h = y if i == 0 else h + y
    return _gelu(jnp.dot(h, w_final, precision=hp) + b_final)


if __name__ == "__main__":
    # Module defaults: input_dim=374, hidden_dim=128, output_dim=128, n_hidden=2.
    B = 256
    input_dim, hidden_dim, output_dim, n_hidden = 374, 128, 128, 2
    eps = 1e-5  # BatchNorm1d default eps

    key = jax.random.PRNGKey(0)
    keys = iter(jax.random.split(key, 1 + 6 * n_hidden + 2))

    x = jax.random.normal(next(keys), (B, input_dim), dtype=jnp.float32)

    block_params = []
    d_in = input_dim
    for i in range(n_hidden):
        bound = 1.0 / math.sqrt(d_in)
        w = jax.random.uniform(next(keys), (d_in, hidden_dim), jnp.float32, -bound, bound)
        b = jax.random.uniform(next(keys), (1, hidden_dim), jnp.float32, -bound, bound)
        gamma = jax.random.uniform(next(keys), (1, hidden_dim), jnp.float32, 0.5, 1.5)
        beta = 0.1 * jax.random.normal(next(keys), (1, hidden_dim), jnp.float32)
        r_mean = 0.1 * jax.random.normal(next(keys), (1, hidden_dim), jnp.float32)
        r_var = jax.random.uniform(next(keys), (1, hidden_dim), jnp.float32, 0.5, 1.5)
        bn_scale = gamma / jnp.sqrt(r_var + eps)
        bn_shift = beta - r_mean * bn_scale
        block_params.append((w, b, bn_scale, bn_shift))
        d_in = hidden_dim

    bound = 1.0 / math.sqrt(hidden_dim)
    w_final = jax.random.uniform(next(keys), (hidden_dim, output_dim), jnp.float32, -bound, bound)
    b_final = jax.random.uniform(next(keys), (1, output_dim), jnp.float32, -bound, bound)

    out = e_encoder(x, block_params, w_final, b_final)
    out = jax.block_until_ready(out)

    ref = reference(x, block_params, w_final, b_final)
    assert out.shape == (B, output_dim)
    max_err = jnp.max(jnp.abs(out - ref))
    assert jnp.allclose(out, ref, atol=5e-4, rtol=5e-4), f"max abs err {max_err}"

    print("KERNEL_OK")
</pallas_src>

<mosaic_0001>
module attributes {stable_mosaic.version = 11 : i64} {
  func.func @e_encoder_kernel(%arg0: i32, %arg1: memref<128x384xf32, #tpu.memory_space<vmem>>, %arg2: memref<384x128xf32, #tpu.memory_space<vmem>>, %arg3: memref<1x128xf32, #tpu.memory_space<vmem>>, %arg4: memref<1x128xf32, #tpu.memory_space<vmem>>, %arg5: memref<1x128xf32, #tpu.memory_space<vmem>>, %arg6: memref<128x128xf32, #tpu.memory_space<vmem>>, %arg7: memref<1x128xf32, #tpu.memory_space<vmem>>, %arg8: memref<1x128xf32, #tpu.memory_space<vmem>>, %arg9: memref<1x128xf32, #tpu.memory_space<vmem>>, %arg10: memref<128x128xf32, #tpu.memory_space<vmem>>, %arg11: memref<1x128xf32, #tpu.memory_space<vmem>>, %arg12: memref<128x128xf32, #tpu.memory_space<vmem>>) attributes {dimension_semantics = [#tpu.dimension_semantics<parallel>], iteration_bounds = array<i64: 2>, scalar_prefetch = 0 : i64, scratch_operands = 0 : i64, tpu.core_type = #tpu.core_type<tc>, window_params = [{transform_indices = @transform_0, window_bounds = array<i64: 128, 384>}, {pipeline_mode = #tpu.pipeline_mode<synchronous>, transform_indices = @transform_1, window_bounds = array<i64: 384, 128>}, {pipeline_mode = #tpu.pipeline_mode<synchronous>, transform_indices = @transform_2, window_bounds = array<i64: 1, 128>}, {pipeline_mode = #tpu.pipeline_mode<synchronous>, transform_indices = @transform_3, window_bounds = array<i64: 1, 128>}, {pipeline_mode = #tpu.pipeline_mode<synchronous>, transform_indices = @transform_4, window_bounds = array<i64: 1, 128>}, {pipeline_mode = #tpu.pipeline_mode<synchronous>, transform_indices = @transform_5, window_bounds = array<i64: 128, 128>}, {pipeline_mode = #tpu.pipeline_mode<synchronous>, transform_indices = @transform_6, window_bounds = array<i64: 1, 128>}, {pipeline_mode = #tpu.pipeline_mode<synchronous>, transform_indices = @transform_7, window_bounds = array<i64: 1, 128>}, {pipeline_mode = #tpu.pipeline_mode<synchronous>, transform_indices = @transform_8, window_bounds = array<i64: 1, 128>}, {pipeline_mode = #tpu.pipeline_mode<synchronous>, transform_indices = @transform_9, window_bounds = array<i64: 128, 128>}, {pipeline_mode = #tpu.pipeline_mode<synchronous>, transform_indices = @transform_10, window_bounds = array<i64: 1, 128>}, {transform_indices = @transform_11, window_bounds = array<i64: 128, 128>}]} {
    %c0 = arith.constant 0 : index
    %c0_0 = arith.constant 0 : index
    %0 = vector.load %arg1[%c0, %c0_0] : memref<128x384xf32, #tpu.memory_space<vmem>>, vector<128x384xf32>
    %c0_1 = arith.constant 0 : index
    %c0_2 = arith.constant 0 : index
    %1 = vector.load %arg2[%c0_1, %c0_2] : memref<384x128xf32, #tpu.memory_space<vmem>>, vector<384x128xf32>
    %cst = arith.constant dense<0.000000e+00> : vector<128x128xf32>
    %2 = tpu.matmul %0, %1, %cst {dimension_numbers = #tpu.dot_dimension_numbers<[1], [0], [0], [1], [0, 0, 1, 1], [], []>} : vector<128x384xf32>, vector<384x128xf32>, vector<128x128xf32> -> vector<128x128xf32>
    %c0_3 = arith.constant 0 : index
    %c0_4 = arith.constant 0 : index
    %3 = vector.load %arg3[%c0_3, %c0_4] : memref<1x128xf32, #tpu.memory_space<vmem>>, vector<1x128xf32>
    %4 = vector.broadcast %3 : vector<1x128xf32> to vector<128x128xf32>
    %5 = arith.addf %2, %4 : vector<128x128xf32>
    %cst_5 = arith.constant 5.000000e-01 : f32
    %6 = vector.broadcast %cst_5 : f32 to vector<128x128xf32>
    %7 = arith.mulf %6, %5 : vector<128x128xf32>
    %cst_6 = arith.constant 4.471500e-02 : f32
    %8 = vector.broadcast %cst_6 : f32 to vector<128x128xf32>
    %9 = arith.mulf %8, %5 : vector<128x128xf32>
    %10 = arith.mulf %9, %5 : vector<128x128xf32>
    %11 = arith.mulf %10, %5 : vector<128x128xf32>
    %12 = arith.addf %5, %11 : vector<128x128xf32>
    %cst_7 = arith.constant 0.797884583 : f32
    %13 = vector.broadcast %cst_7 : f32 to vector<128x128xf32>
    %14 = arith.mulf %13, %12 : vector<128x128xf32>
    %15 = math.tanh %14 : vector<128x128xf32>
    %cst_8 = arith.constant 1.000000e+00 : f32
    %16 = vector.broadcast %cst_8 : f32 to vector<128x128xf32>
    %17 = arith.addf %16, %15 : vector<128x128xf32>
    %18 = arith.mulf %7, %17 : vector<128x128xf32>
    %c0_9 = arith.constant 0 : index
    %c0_10 = arith.constant 0 : index
    %19 = vector.load %arg4[%c0_9, %c0_10] : memref<1x128xf32, #tpu.memory_space<vmem>>, vector<1x128xf32>
    %20 = vector.broadcast %19 : vector<1x128xf32> to vector<128x128xf32>
    %21 = arith.mulf %18, %20 : vector<128x128xf32>
    %c0_11 = arith.constant 0 : index
    %c0_12 = arith.constant 0 : index
    %22 = vector.load %arg5[%c0_11, %c0_12] : memref<1x128xf32, #tpu.memory_space<vmem>>, vector<1x128xf32>
    %23 = vector.broadcast %22 : vector<1x128xf32> to vector<128x128xf32>
    %24 = arith.addf %21, %23 : vector<128x128xf32>
    %c0_13 = arith.constant 0 : index
    %c0_14 = arith.constant 0 : index
    %25 = vector.load %arg6[%c0_13, %c0_14] : memref<128x128xf32, #tpu.memory_space<vmem>>, vector<128x128xf32>
    %cst_15 = arith.constant dense<0.000000e+00> : vector<128x128xf32>
    %26 = tpu.matmul %24, %25, %cst_15 {dimension_numbers = #tpu.dot_dimension_numbers<[1], [0], [0], [1], [0, 0, 1, 1], [], []>} : vector<128x128xf32>, vector<128x128xf32>, vector<128x128xf32> -> vector<128x128xf32>
    %c0_16 = arith.constant 0 : index
    %c0_17 = arith.constant 0 : index
    %27 = vector.load %arg7[%c0_16, %c0_17] : memref<1x128xf32, #tpu.memory_space<vmem>>, vector<1x128xf32>
    %28 = vector.broadcast %27 : vector<1x128xf32> to vector<128x128xf32>
    %29 = arith.addf %26, %28 : vector<128x128xf32>
    %cst_18 = arith.constant 5.000000e-01 : f32
    %30 = vector.broadcast %cst_18 : f32 to vector<128x128xf32>
    %31 = arith.mulf %30, %29 : vector<128x128xf32>
    %cst_19 = arith.constant 4.471500e-02 : f32
    %32 = vector.broadcast %cst_19 : f32 to vector<128x128xf32>
    %33 = arith.mulf %32, %29 : vector<128x128xf32>
    %34 = arith.mulf %33, %29 : vector<128x128xf32>
    %35 = arith.mulf %34, %29 : vector<128x128xf32>
    %36 = arith.addf %29, %35 : vector<128x128xf32>
    %cst_20 = arith.constant 0.797884583 : f32
    %37 = vector.broadcast %cst_20 : f32 to vector<128x128xf32>
    %38 = arith.mulf %37, %36 : vector<128x128xf32>
    %39 = math.tanh %38 : vector<128x128xf32>
    %cst_21 = arith.constant 1.000000e+00 : f32
    %40 = vector.broadcast %cst_21 : f32 to vector<128x128xf32>
    %41 = arith.addf %40, %39 : vector<128x128xf32>
    %42 = arith.mulf %31, %41 : vector<128x128xf32>
    %c0_22 = arith.constant 0 : index
    %c0_23 = arith.constant 0 : index
    %43 = vector.load %arg8[%c0_22, %c0_23] : memref<1x128xf32, #tpu.memory_space<vmem>>, vector<1x128xf32>
    %44 = vector.broadcast %43 : vector<1x128xf32> to vector<128x128xf32>
    %45 = arith.mulf %42, %44 : vector<128x128xf32>
    %c0_24 = arith.constant 0 : index
    %c0_25 = arith.constant 0 : index
    %46 = vector.load %arg9[%c0_24, %c0_25] : memref<1x128xf32, #tpu.memory_space<vmem>>, vector<1x128xf32>
    %47 = vector.broadcast %46 : vector<1x128xf32> to vector<128x128xf32>
    %48 = arith.addf %45, %47 : vector<128x128xf32>
    %49 = arith.addf %24, %48 : vector<128x128xf32>
    %c0_26 = arith.constant 0 : index
    %c0_27 = arith.constant 0 : index
    %50 = vector.load %arg10[%c0_26, %c0_27] : memref<128x128xf32, #tpu.memory_space<vmem>>, vector<128x128xf32>
    %cst_28 = arith.constant dense<0.000000e+00> : vector<128x128xf32>
    %51 = tpu.matmul %49, %50, %cst_28 {dimension_numbers = #tpu.dot_dimension_numbers<[1], [0], [0], [1], [0, 0, 1, 1], [], []>} : vector<128x128xf32>, vector<128x128xf32>, vector<128x128xf32> -> vector<128x128xf32>
    %c0_29 = arith.constant 0 : index
    %c0_30 = arith.constant 0 : index
    %52 = vector.load %arg11[%c0_29, %c0_30] : memref<1x128xf32, #tpu.memory_space<vmem>>, vector<1x128xf32>
    %53 = vector.broadcast %52 : vector<1x128xf32> to vector<128x128xf32>
    %54 = arith.addf %51, %53 : vector<128x128xf32>
    %cst_31 = arith.constant 5.000000e-01 : f32
    %55 = vector.broadcast %cst_31 : f32 to vector<128x128xf32>
    %56 = arith.mulf %55, %54 : vector<128x128xf32>
    %cst_32 = arith.constant 4.471500e-02 : f32
    %57 = vector.broadcast %cst_32 : f32 to vector<128x128xf32>
    %58 = arith.mulf %57, %54 : vector<128x128xf32>
    %59 = arith.mulf %58, %54 : vector<128x128xf32>
    %60 = arith.mulf %59, %54 : vector<128x128xf32>
    %61 = arith.addf %54, %60 : vector<128x128xf32>
    %cst_33 = arith.constant 0.797884583 : f32
    %62 = vector.broadcast %cst_33 : f32 to vector<128x128xf32>
    %63 = arith.mulf %62, %61 : vector<128x128xf32>
    %64 = math.tanh %63 : vector<128x128xf32>
    %cst_34 = arith.constant 1.000000e+00 : f32
    %65 = vector.broadcast %cst_34 : f32 to vector<128x128xf32>
    %66 = arith.addf %65, %64 : vector<128x128xf32>
    %67 = arith.mulf %56, %66 : vector<128x128xf32>
    %c0_35 = arith.constant 0 : index
    %c0_36 = arith.constant 0 : index
    %68 = vector.load %arg12[%c0_35, %c0_36] : memref<128x128xf32, #tpu.memory_space<vmem>>, vector<128x128xf32>
    tpu.vector_store %arg12[%c0_35, %c0_36], %67 {strides = array<i32>} : memref<128x128xf32, #tpu.memory_space<vmem>>, vector<128x128xf32>,
    return
  }
  func.func @transform_0(%arg0: i32) -> (i32, i32) {
    %c0_i32 = arith.constant 0 : i32
    %c0_i32_0 = arith.constant 0 : i32
    return %arg0, %c0_i32 : i32, i32
  }
  func.func @transform_1(%arg0: i32) -> (i32, i32) {
    %c0_i32 = arith.constant 0 : i32
    %c0_i32_0 = arith.constant 0 : i32
    %c0_i32_1 = arith.constant 0 : i32
    return %c0_i32, %c0_i32_0 : i32, i32
  }
  func.func @transform_2(%arg0: i32) -> (i32, i32) {
    %c0_i32 = arith.constant 0 : i32
    %c0_i32_0 = arith.constant 0 : i32
    %c0_i32_1 = arith.constant 0 : i32
    return %c0_i32, %c0_i32_0 : i32, i32
  }
  func.func @transform_3(%arg0: i32) -> (i32, i32) {
    %c0_i32 = arith.constant 0 : i32
    %c0_i32_0 = arith.constant 0 : i32
    %c0_i32_1 = arith.constant 0 : i32
    return %c0_i32, %c0_i32_0 : i32, i32
  }
  func.func @transform_4(%arg0: i32) -> (i32, i32) {
    %c0_i32 = arith.constant 0 : i32
    %c0_i32_0 = arith.constant 0 : i32
    %c0_i32_1 = arith.constant 0 : i32
    return %c0_i32, %c0_i32_0 : i32, i32
  }
  func.func @transform_5(%arg0: i32) -> (i32, i32) {
    %c0_i32 = arith.constant 0 : i32
    %c0_i32_0 = arith.constant 0 : i32
    %c0_i32_1 = arith.constant 0 : i32
    return %c0_i32, %c0_i32_0 : i32, i32
  }
  func.func @transform_6(%arg0: i32) -> (i32, i32) {
    %c0_i32 = arith.constant 0 : i32
    %c0_i32_0 = arith.constant 0 : i32
    %c0_i32_1 = arith.constant 0 : i32
    return %c0_i32, %c0_i32_0 : i32, i32
  }
  func.func @transform_7(%arg0: i32) -> (i32, i32) {
    %c0_i32 = arith.constant 0 : i32
    %c0_i32_0 = arith.constant 0 : i32
    %c0_i32_1 = arith.constant 0 : i32
    return %c0_i32, %c0_i32_0 : i32, i32
  }
  func.func @transform_8(%arg0: i32) -> (i32, i32) {
    %c0_i32 = arith.constant 0 : i32
    %c0_i32_0 = arith.constant 0 : i32
    %c0_i32_1 = arith.constant 0 : i32
    return %c0_i32, %c0_i32_0 : i32, i32
  }
  func.func @transform_9(%arg0: i32) -> (i32, i32) {
    %c0_i32 = arith.constant 0 : i32
    %c0_i32_0 = arith.constant 0 : i32
    %c0_i32_1 = arith.constant 0 : i32
    return %c0_i32, %c0_i32_0 : i32, i32
  }
  func.func @transform_10(%arg0: i32) -> (i32, i32) {
    %c0_i32 = arith.constant 0 : i32
    %c0_i32_0 = arith.constant 0 : i32
    %c0_i32_1 = arith.constant 0 : i32
    return %c0_i32, %c0_i32_0 : i32, i32
  }
  func.func @transform_11(%arg0: i32) -> (i32, i32) {
    %c0_i32 = arith.constant 0 : i32
    %c0_i32_0 = arith.constant 0 : i32
    return %arg0, %c0_i32 : i32, i32
  }
}

</mosaic_0001>

<llo_original>
// kernel: tpu_custom_call.1
$region0: #{tpu_custom_call.1}
  #allocation0 [shape = 'u32[]', space=smem, size = 0x4, offset = 0x4, fixed_abs, tag = 'smem constant byte address 0x4 - core index']
  #allocation1 [shape = 'u32[144,128]{1,0:T(1,128)}', space=vmem, size = 0x12000, scoped, tag = 'internal scratch']
  %s0 = inlined_call_operand.hbm [shape: f32[256,384], index: 0, kind: input, shape index: {}]
  %s1 = inlined_call_operand.hbm [shape: f32[384,128], index: 1, kind: input, shape index: {}]
  %s2 = inlined_call_operand.vmem [shape: f32[1,128], index: 2, kind: input, shape index: {}]
  %s3 = inlined_call_operand.vmem [shape: f32[1,128], index: 3, kind: input, shape index: {}]
  %s4 = inlined_call_operand.vmem [shape: f32[1,128], index: 4, kind: input, shape index: {}]
  %s5 = inlined_call_operand.hbm [shape: f32[128,128], index: 5, kind: input, shape index: {}]
  %s6 = inlined_call_operand.vmem [shape: f32[1,128], index: 6, kind: input, shape index: {}]
  %s7 = inlined_call_operand.vmem [shape: f32[1,128], index: 7, kind: input, shape index: {}]
  %s8 = inlined_call_operand.vmem [shape: f32[1,128], index: 8, kind: input, shape index: {}]
  %s9 = inlined_call_operand.hbm [shape: f32[128,128], index: 9, kind: input, shape index: {}]
  %s10 = inlined_call_operand.vmem [shape: f32[1,128], index: 10, kind: input, shape index: {}]
  %s11 = inlined_call_operand.hbm [shape: f32[256,128], index: 11, kind: output, shape index: {}]
  %s12 = sld [smem:[#allocation0]]
  $region93: #{tpu_custom_call.1} parent=0
    _
  %s14 = ssub.s32 1, %s12
  %s15 = scalar_select 0, %s14, %s12
  $region1: #{tpu_custom_call.1} parent=0
    #allocation2 [shape = 'u8[393216]{0}', space=vmem, size = 0x60000, scoped, tag = 'input window, operand 0']
    #allocation3 [shape = 's32[2]{0}', space=sflag, size = 0x8, scoped, tag = 'scoped memory for tpu_custom_call.1']
    #allocation4 [shape = 's32[2]{0}', space=sflag, size = 0x8, scoped, tag = 'scoped memory for tpu_custom_call.1']
    #allocation5 [shape = 'u8[196608]{0}', space=vmem, size = 0x30000, scoped, tag = 'input window, operand 1, single buffered']
    #allocation6 [shape = 's32[1]{0}', space=sflag, size = 0x4, scoped, tag = 'scoped memory for tpu_custom_call.1']
    #allocation7 [shape = 'u8[65536]{0}', space=vmem, size = 0x10000, scoped, tag = 'input window, operand 5, single buffered']
    #allocation8 [shape = 'u8[65536]{0}', space=vmem, size = 0x10000, scoped, tag = 'input window, operand 9, single buffered']
    #allocation9 [shape = 's32[1]{0}', space=sflag, size = 0x4, scoped, tag = 'scoped memory for tpu_custom_call.1']
    #allocation10 [shape = 'u8[131072]{0}', space=vmem, size = 0x20000, scoped, tag = 'output window, operand 0']
    %16 = vsyncpa [#allocation3], 0
    %s17 = scalar_lea.sflag [#allocation3], 1
    %18 = vsyncpa %s17, 0
    %19 = vsyncpa [#allocation6], 0
    %20 = vsyncpa [#allocation9], 0
    %21 = vsyncpa [#allocation4], 0
    %s22 = scalar_lea.sflag [#allocation4], 1
    %23 = vsyncpa %s22, 0
    loop: start=0, step=1, limit=4
    $region2: #{tpu_custom_call.1} parent=1 // loop_pre_header
      _
    $region3: #{tpu_custom_call.1} parent=1 // loop_header
      %s25 = sphi 0, %s29
      %p26 = scmp.ge.s32.totalorder %s25, 4
      %s35 = sphi 0, %s37
      %s38 = sphi 0, %s35
      %s39 = sphi 0, %s38
      %s55 = sphi 0, %s39
      %s59 = sphi 0, %s59
      %s61 = sphi 0, %s59
      %s62 = sphi 0, %s61
      %s76 = sphi 0, %s62
      %s80 = sphi 0, %s80
      %s82 = sphi 0, %s80
      %s83 = sphi 0, %s82
      %s97 = sphi 0, %s83
      %s101 = sphi 0, %s101
      %s103 = sphi 0, %s101
      %s104 = sphi 0, %s103
      %s118 = sphi 0, %s104
      %s122 = sphi 0, %s122
      %s124 = sphi 0, %s122
      %s125 = sphi 0, %s124
      %s139 = sphi 0, %s125
      %s143 = sphi 0, %s143
      %s145 = sphi 0, %s143
      %s146 = sphi 0, %s145
      %s160 = sphi 0, %s146
      %s164 = sphi 0, %s164
      %s166 = sphi 0, %s164
      %s167 = sphi 0, %s166
      %s181 = sphi 0, %s167
      %s185 = sphi 0, %s185
      %s187 = sphi 0, %s185
      %s188 = sphi 0, %s187
      %s202 = sphi 0, %s188
      %s206 = sphi 0, %s206
      %s208 = sphi 0, %s206
      %s209 = sphi 0, %s208
      %s223 = sphi 0, %s209
      %s227 = sphi 0, %s227
      %s229 = sphi 0, %s227
      %s230 = sphi 0, %s229
      %s244 = sphi 0, %s230
      %s248 = sphi 0, %s248
      %s250 = sphi 0, %s248
      %s251 = sphi 0, %s250
      %s265 = sphi 0, %s251
      %s271 = sphi 0, %s273
      %s274 = sphi 0, %s271
      %s275 = sphi 0, %s274
      %s291 = sphi 0, %s275
    $region4: #{tpu_custom_call.1} parent=1 // loop_header_branch
      %28 = sbr.rel (%p26) target = $region8
    $region5: #{tpu_custom_call.1} parent=1 // loop_body
      %s30 = ssub.s32 %s25, 1
      %s31 = ssub.s32 %s25, 2
      %s32 = sadd.s32 %s25, 1
      %s33 = ssub.s32 %s25, %s32
      %p34 = scmp.eq.s32.totalorder %s33, 0
      %s36 = sadd.s32 %s35, 1
      %s37 = scalar_select %p34, %s35, %s36
      %p40 = pneg %p34
      %p41 = scmp.eq.s32.totalorder %s25, 1
      %p42 = por %p40, %p41
      %p43 = scmp.ne.s32.totalorder %s35, %s38
      %p44 = scmp.eq.s32.totalorder %s25, 0
      %p45 = por %p43, %p44
      %p46 = scmp.ne.s32.totalorder %s35, %s38
      %p47 = scmp.eq.s32.totalorder %s30, 1
      %p48 = por %p46, %p47
      %p49 = scmp.ne.s32.totalorder %s38, %s39
      %p50 = scmp.eq.s32.totalorder %s30, 0
      %p51 = por %p49, %p50
      %p52 = scmp.ne.s32.totalorder %s38, %s39
      %p53 = scmp.eq.s32.totalorder %s31, 1
      %p54 = por %p52, %p53
      %p56 = scmp.ne.s32.totalorder %s39, %s55
      %p57 = scmp.eq.s32.totalorder %s31, 0
      %p58 = por %p56, %p57
      %s60 = sadd.s32 %s59, 1
      %p63 = scmp.eq.s32.totalorder %s25, 1
      %p64 = scmp.ne.s32.totalorder %s59, %s61
      %p65 = scmp.eq.s32.totalorder %s25, 0
      %p66 = por %p64, %p65
      %p67 = scmp.ne.s32.totalorder %s59, %s61
      %p68 = scmp.eq.s32.totalorder %s30, 1
      %p69 = por %p67, %p68
      %p70 = scmp.ne.s32.totalorder %s61, %s62
      %p71 = scmp.eq.s32.totalorder %s30, 0
      %p72 = por %p70, %p71
      %p73 = scmp.ne.s32.totalorder %s61, %s62
      %p74 = scmp.eq.s32.totalorder %s31, 1
      %p75 = por %p73, %p74
      %p77 = scmp.ne.s32.totalorder %s62, %s76
      %p78 = scmp.eq.s32.totalorder %s31, 0
      %p79 = por %p77, %p78
      %s81 = sadd.s32 %s80, 1
      %p84 = scmp.eq.s32.totalorder %s25, 1
      %p85 = scmp.ne.s32.totalorder %s80, %s82
      %p86 = scmp.eq.s32.totalorder %s25, 0
      %p87 = por %p85, %p86
      %p88 = scmp.ne.s32.totalorder %s80, %s82
      %p89 = scmp.eq.s32.totalorder %s30, 1
      %p90 = por %p88, %p89
      %p91 = scmp.ne.s32.totalorder %s82, %s83
      %p92 = scmp.eq.s32.totalorder %s30, 0
      %p93 = por %p91, %p92
      %p94 = scmp.ne.s32.totalorder %s82, %s83
      %p95 = scmp.eq.s32.totalorder %s31, 1
      %p96 = por %p94, %p95
      %p98 = scmp.ne.s32.totalorder %s83, %s97
      %p99 = scmp.eq.s32.totalorder %s31, 0
      %p100 = por %p98, %p99
      %s102 = sadd.s32 %s101, 1
      %p105 = scmp.eq.s32.totalorder %s25, 1
      %p106 = scmp.ne.s32.totalorder %s101, %s103
      %p107 = scmp.eq.s32.totalorder %s25, 0
      %p108 = por %p106, %p107
      %p109 = scmp.ne.s32.totalorder %s101, %s103
      %p110 = scmp.eq.s32.totalorder %s30, 1
      %p111 = por %p109, %p110
      %p112 = scmp.ne.s32.totalorder %s103, %s104
      %p113 = scmp.eq.s32.totalorder %s30, 0
      %p114 = por %p112, %p113
      %p115 = scmp.ne.s32.totalorder %s103, %s104
      %p116 = scmp.eq.s32.totalorder %s31, 1
      %p117 = por %p115, %p116
      %p119 = scmp.ne.s32.totalorder %s104, %s118
      %p120 = scmp.eq.s32.totalorder %s31, 0
      %p121 = por %p119, %p120
      %s123 = sadd.s32 %s122, 1
      %p126 = scmp.eq.s32.totalorder %s25, 1
      %p127 = scmp.ne.s32.totalorder %s122, %s124
      %p128 = scmp.eq.s32.totalorder %s25, 0
      %p129 = por %p127, %p128
      %p130 = scmp.ne.s32.totalorder %s122, %s124
      %p131 = scmp.eq.s32.totalorder %s30, 1
      %p132 = por %p130, %p131
      %p133 = scmp.ne.s32.totalorder %s124, %s125
      %p134 = scmp.eq.s32.totalorder %s30, 0
      %p135 = por %p133, %p134
      %p136 = scmp.ne.s32.totalorder %s124, %s125
      %p137 = scmp.eq.s32.totalorder %s31, 1
      %p138 = por %p136, %p137
      %p140 = scmp.ne.s32.totalorder %s125, %s139
      %p141 = scmp.eq.s32.totalorder %s31, 0
      %p142 = por %p140, %p141
      %s144 = sadd.s32 %s143, 1
      %p147 = scmp.eq.s32.totalorder %s25, 1
      %p148 = scmp.ne.s32.totalorder %s143, %s145
      %p149 = scmp.eq.s32.totalorder %s25, 0
      %p150 = por %p148, %p149
      %p151 = scmp.ne.s32.totalorder %s143, %s145
      %p152 = scmp.eq.s32.totalorder %s30, 1
      %p153 = por %p151, %p152
      %p154 = scmp.ne.s32.totalorder %s145, %s146
      %p155 = scmp.eq.s32.totalorder %s30, 0
      %p156 = por %p154, %p155
      %p157 = scmp.ne.s32.totalorder %s145, %s146
      %p158 = scmp.eq.s32.totalorder %s31, 1
      %p159 = por %p157, %p158
      %p161 = scmp.ne.s32.totalorder %s146, %s160
      %p162 = scmp.eq.s32.totalorder %s31, 0
      %p163 = por %p161, %p162
      %s165 = sadd.s32 %s164, 1
      %p168 = scmp.eq.s32.totalorder %s25, 1
      %p169 = scmp.ne.s32.totalorder %s164, %s166
      %p170 = scmp.eq.s32.totalorder %s25, 0
      %p171 = por %p169, %p170
      %p172 = scmp.ne.s32.totalorder %s164, %s166
      %p173 = scmp.eq.s32.totalorder %s30, 1
      %p174 = por %p172, %p173
      %p175 = scmp.ne.s32.totalorder %s166, %s167
      %p176 = scmp.eq.s32.totalorder %s30, 0
      %p177 = por %p175, %p176
      %p178 = scmp.ne.s32.totalorder %s166, %s167
      %p179 = scmp.eq.s32.totalorder %s31, 1
      %p180 = por %p178, %p179
      %p182 = scmp.ne.s32.totalorder %s167, %s181
      %p183 = scmp.eq.s32.totalorder %s31, 0
      %p184 = por %p182, %p183
      %s186 = sadd.s32 %s185, 1
      %p189 = scmp.eq.s32.totalorder %s25, 1
      %p190 = scmp.ne.s32.totalorder %s185, %s187
      %p191 = scmp.eq.s32.totalorder %s25, 0
      %p192 = por %p190, %p191
      %p193 = scmp.ne.s32.totalorder %s185, %s187
      %p194 = scmp.eq.s32.totalorder %s30, 1
      %p195 = por %p193, %p194
      %p196 = scmp.ne.s32.totalorder %s187, %s188
      %p197 = scmp.eq.s32.totalorder %s30, 0
      %p198 = por %p196, %p197
      %p199 = scmp.ne.s32.totalorder %s187, %s188
      %p200 = scmp.eq.s32.totalorder %s31, 1
      %p201 = por %p199, %p200
      %p203 = scmp.ne.s32.totalorder %s188, %s202
      %p204 = scmp.eq.s32.totalorder %s31, 0
      %p205 = por %p203, %p204
      %s207 = sadd.s32 %s206, 1
      %p210 = scmp.eq.s32.totalorder %s25, 1
      %p211 = scmp.ne.s32.totalorder %s206, %s208
      %p212 = scmp.eq.s32.totalorder %s25, 0
      %p213 = por %p211, %p212
      %p214 = scmp.ne.s32.totalorder %s206, %s208
      %p215 = scmp.eq.s32.totalorder %s30, 1
      %p216 = por %p214, %p215
      %p217 = scmp.ne.s32.totalorder %s208, %s209
      %p218 = scmp.eq.s32.totalorder %s30, 0
      %p219 = por %p217, %p218
      %p220 = scmp.ne.s32.totalorder %s208, %s209
      %p221 = scmp.eq.s32.totalorder %s31, 1
      %p222 = por %p220, %p221
      %p224 = scmp.ne.s32.totalorder %s209, %s223
      %p225 = scmp.eq.s32.totalorder %s31, 0
      %p226 = por %p224, %p225
      %s228 = sadd.s32 %s227, 1
      %p231 = scmp.eq.s32.totalorder %s25, 1
      %p232 = scmp.ne.s32.totalorder %s227, %s229
      %p233 = scmp.eq.s32.totalorder %s25, 0
      %p234 = por %p232, %p233
      %p235 = scmp.ne.s32.totalorder %s227, %s229
      %p236 = scmp.eq.s32.totalorder %s30, 1
      %p237 = por %p235, %p236
      %p238 = scmp.ne.s32.totalorder %s229, %s230
      %p239 = scmp.eq.s32.totalorder %s30, 0
      %p240 = por %p238, %p239
      %p241 = scmp.ne.s32.totalorder %s229, %s230
      %p242 = scmp.eq.s32.totalorder %s31, 1
      %p243 = por %p241, %p242
      %p245 = scmp.ne.s32.totalorder %s230, %s244
      %p246 = scmp.eq.s32.totalorder %s31, 0
      %p247 = por %p245, %p246
      %s249 = sadd.s32 %s248, 1
      %p252 = scmp.eq.s32.totalorder %s25, 1
      %p253 = scmp.ne.s32.totalorder %s248, %s250
      %p254 = scmp.eq.s32.totalorder %s25, 0
      %p255 = por %p253, %p254
      %p256 = scmp.ne.s32.totalorder %s248, %s250
      %p257 = scmp.eq.s32.totalorder %s30, 1
      %p258 = por %p256, %p257
      %p259 = scmp.ne.s32.totalorder %s250, %s251
      %p260 = scmp.eq.s32.totalorder %s30, 0
      %p261 = por %p259, %p260
      %p262 = scmp.ne.s32.totalorder %s250, %s251
      %p263 = scmp.eq.s32.totalorder %s31, 1
      %p264 = por %p262, %p263
      %p266 = scmp.ne.s32.totalorder %s251, %s265
      %p267 = scmp.eq.s32.totalorder %s31, 0
      %p268 = por %p266, %p267
      %s269 = ssub.s32 %s25, %s32
      %p270 = scmp.eq.s32.totalorder %s269, 0
      %s272 = sadd.s32 %s271, 1
      %s273 = scalar_select %p270, %s271, %s272
      %p276 = pneg %p270
      %p277 = scmp.eq.s32.totalorder %s25, 1
      %p278 = por %p276, %p277
      %p279 = scmp.ne.s32.totalorder %s271, %s274
      %p280 = scmp.eq.s32.totalorder %s25, 0
      %p281 = por %p279, %p280
      %p282 = scmp.ne.s32.totalorder %s271, %s274
      %p283 = scmp.eq.s32.totalorder %s30, 1
      %p284 = por %p282, %p283
      %p285 = scmp.ne.s32.totalorder %s274, %s275
      %p286 = scmp.eq.s32.totalorder %s30, 0
      %p287 = por %p285, %p286
      %p288 = scmp.ne.s32.totalorder %s274, %s275
      %p289 = scmp.eq.s32.totalorder %s31, 1
      %p290 = por %p288, %p289
      %p292 = scmp.ne.s32.totalorder %s275, %s291
      %p293 = scmp.eq.s32.totalorder %s31, 0
      %p294 = por %p292, %p293
      %p295 = scmp.le.s32.totalorder 1, %s25
      %p296 = scmp.lt.s32.totalorder %s25, 3
      %p297 = pnand %p295, %p296
      %p298 = pneg %p297
      // Predicated region
      $region9: #{tpu_custom_call.1} parent=5 // pred_check
        _
      $region10: #{tpu_custom_call.1} parent=5 // pred_check_branch
        %300 = sbr.rel (%p297) target = $region12
      $region11: #{tpu_custom_call.1} parent=5 // pred_region
        %s301 = ssub.s32 %s25, 1
        // Predicated region
        $region13: #{tpu_custom_call.1} parent=11 // pred_check
          %p302 = pneg %p72
        $region14: #{tpu_custom_call.1} parent=11 // pred_check_branch
          %304 = sbr.rel (%p302) target = $region16
        $region15: #{tpu_custom_call.1} parent=11 // pred_region
          %s306 = ssub.s32 6144, 6144
          %307 = vsyncadd [#allocation6], %s306
          %s308 = sshll.u32 [#allocation5], 4
          %s309 = int_to_ptr.vmem [resolvable:$true] %s308
          %314 = dma.hbm_to_vmem [thread:$0]  %s1, 6144, %s309, [#allocation6], 128, 128, 8
        $region16: #{tpu_custom_call.1} parent=11 // pred_fallthru
          _
        // Predicated region
        $region17: #{tpu_custom_call.1} parent=11 // pred_check
          %p315 = pneg %p93
        $region18: #{tpu_custom_call.1} parent=11 // pred_check_branch
          %317 = sbr.rel (%p315) target = $region20
        $region19: #{tpu_custom_call.1} parent=11 // pred_region
          _
        $region20: #{tpu_custom_call.1} parent=11 // pred_fallthru
          _
        // Predicated region
        $region21: #{tpu_custom_call.1} parent=11 // pred_check
          %p318 = pneg %p114
        $region22: #{tpu_custom_call.1} parent=11 // pred_check_branch
          %320 = sbr.rel (%p318) target = $region24
        $region23: #{tpu_custom_call.1} parent=11 // pred_region
          _
        $region24: #{tpu_custom_call.1} parent=11 // pred_fallthru
          _
        // Predicated region
        $region25: #{tpu_custom_call.1} parent=11 // pred_check
          %p321 = pneg %p135
        $region26: #{tpu_custom_call.1} parent=11 // pred_check_branch
          %323 = sbr.rel (%p321) target = $region28
        $region27: #{tpu_custom_call.1} parent=11 // pred_region
          _
        $region28: #{tpu_custom_call.1} parent=11 // pred_fallthru
          _
        // Predicated region
        $region29: #{tpu_custom_call.1} parent=11 // pred_check
          %p324 = pneg %p156
        $region30: #{tpu_custom_call.1} parent=11 // pred_check_branch
          %326 = sbr.rel (%p324) target = $region32
        $region31: #{tpu_custom_call.1} parent=11 // pred_region
          %s328 = ssub.s32 2048, 2048
          %329 = vsyncadd [#allocation6], %s328
          %s330 = sshll.u32 [#allocation7], 4
          %s331 = int_to_ptr.vmem [resolvable:$true] %s330
          %336 = dma.hbm_to_vmem [thread:$0]  %s5, 2048, %s331, [#allocation6], 128, 128, 8
        $region32: #{tpu_custom_call.1} parent=11 // pred_fallthru
          _
        // Predicated region
        $region33: #{tpu_custom_call.1} parent=11 // pred_check
          %p337 = pneg %p177
        $region34: #{tpu_custom_call.1} parent=11 // pred_check_branch
          %339 = sbr.rel (%p337) target = $region36
        $region35: #{tpu_custom_call.1} parent=11 // pred_region
          _
        $region36: #{tpu_custom_call.1} parent=11 // pred_fallthru
          _
        // Predicated region
        $region37: #{tpu_custom_call.1} parent=11 // pred_check
          %p340 = pneg %p198
        $region38: #{tpu_custom_call.1} parent=11 // pred_check_branch
          %342 = sbr.rel (%p340) target = $region40
        $region39: #{tpu_custom_call.1} parent=11 // pred_region
          _
        $region40: #{tpu_custom_call.1} parent=11 // pred_fallthru
          _
        // Predicated region
        $region41: #{tpu_custom_call.1} parent=11 // pred_check
          %p343 = pneg %p219
        $region42: #{tpu_custom_call.1} parent=11 // pred_check_branch
          %345 = sbr.rel (%p343) target = $region44
        $region43: #{tpu_custom_call.1} parent=11 // pred_region
          _
        $region44: #{tpu_custom_call.1} parent=11 // pred_fallthru
          _
        // Predicated region
        $region45: #{tpu_custom_call.1} parent=11 // pred_check
          %p346 = pneg %p240
        $region46: #{tpu_custom_call.1} parent=11 // pred_check_branch
          %348 = sbr.rel (%p346) target = $region48
        $region47: #{tpu_custom_call.1} parent=11 // pred_region
          %s350 = ssub.s32 2048, 2048
          %351 = vsyncadd [#allocation9], %s350
          %s352 = sshll.u32 [#allocation8], 4
          %s353 = int_to_ptr.vmem [resolvable:$true] %s352
          %358 = dma.hbm_to_vmem [thread:$0]  %s9, 2048, %s353, [#allocation9], 128, 128, 8
        $region48: #{tpu_custom_call.1} parent=11 // pred_fallthru
          _
        // Predicated region
        $region49: #{tpu_custom_call.1} parent=11 // pred_check
          %p359 = pneg %p261
        $region50: #{tpu_custom_call.1} parent=11 // pred_check_branch
          %361 = sbr.rel (%p359) target = $region52
        $region51: #{tpu_custom_call.1} parent=11 // pred_region
          _
        $region52: #{tpu_custom_call.1} parent=11 // pred_fallthru
          _
      $region12: #{tpu_custom_call.1} parent=5 // pred_fallthru
        _
      %p362 = scmp.lt.s32.totalorder %s25, 2
      // Predicated region
      $region53: #{tpu_custom_call.1} parent=5 // pred_check
        %p363 = pneg %p362
      $region54: #{tpu_custom_call.1} parent=5 // pred_check_branch
        %365 = sbr.rel (%p363) target = $region56
      $region55: #{tpu_custom_call.1} parent=5 // pred_region
        // Predicated region
        $region57: #{tpu_custom_call.1} parent=55 // pred_check
          %p366 = pneg %p45
        $region58: #{tpu_custom_call.1} parent=55 // pred_check_branch
          %368 = sbr.rel (%p366) target = $region60
        $region59: #{tpu_custom_call.1} parent=55 // pred_region
          %s369 = sand.u32 %s35, 1
          %s370 = scalar_lea.sflag [#allocation3], %s369
          %s371 = sand.u32 %s35, 1
          %s372 = smul.addr %s371, 384
          %s373 = scalar_lea.vmem [#allocation2], %s372
          %s374 = smul.u32 16, %s25
          %s376 = ssub.s32 6144, 6144
          %377 = vsyncadd %s370, %s376
          %s378 = smul.addr %s374, 3
          %s379 = smul.addr %s378, 128
          %s380 = scalar_lea.hbm %s0, %s379
          %s381 = sshll.u32 %s373, 4
          %s382 = int_to_ptr.vmem [resolvable:$true] %s381
          %387 = dma.hbm_to_vmem [thread:$0]  %s380, 6144, %s382, %s370, 384, 384, 24
        $region60: #{tpu_custom_call.1} parent=55 // pred_fallthru
          _
      $region56: #{tpu_custom_call.1} parent=5 // pred_fallthru
        _
      %p388 = scmp.le.s32.totalorder 1, %s25
      %p389 = scmp.lt.s32.totalorder %s25, 3
      %p390 = pnand %p388, %p389
      %p391 = pneg %p390
      // Predicated region
      $region61: #{tpu_custom_call.1} parent=5 // pred_check
        _
      $region62: #{tpu_custom_call.1} parent=5 // pred_check_branch
        %393 = sbr.rel (%p390) target = $region64
      $region63: #{tpu_custom_call.1} parent=5 // pred_region
        %s394 = ssub.s32 %s25, 1
        %s395 = sand.u32 %s38, 1
        %s396 = scalar_lea.sflag [#allocation3], %s395
        %s397 = sand.u32 %s38, 1
        %s398 = smul.addr %s397, 384
        %s399 = scalar_lea.vmem [#allocation2], %s398
        // Predicated region
        $region65: #{tpu_custom_call.1} parent=63 // pred_check
          %p400 = pneg %p51
        $region66: #{tpu_custom_call.1} parent=63 // pred_check_branch
          %402 = sbr.rel (%p400) target = $region68
        $region67: #{tpu_custom_call.1} parent=63 // pred_region
          %403 = dma.done %s396, 6144
        $region68: #{tpu_custom_call.1} parent=63 // pred_fallthru
          _
        // Predicated region
        $region69: #{tpu_custom_call.1} parent=63 // pred_check
          %p404 = pneg %p72
        $region70: #{tpu_custom_call.1} parent=63 // pred_check_branch
          %406 = sbr.rel (%p404) target = $region72
        $region71: #{tpu_custom_call.1} parent=63 // pred_region
          %407 = dma.done [#allocation6], 6144
        $region72: #{tpu_custom_call.1} parent=63 // pred_fallthru
          _
        // Predicated region
        $region73: #{tpu_custom_call.1} parent=63 // pred_check
          %p408 = pneg %p156
        $region74: #{tpu_custom_call.1} parent=63 // pred_check_branch
          %410 = sbr.rel (%p408) target = $region76
        $region75: #{tpu_custom_call.1} parent=63 // pred_region
          %411 = dma.done [#allocation6], 2048
        $region76: #{tpu_custom_call.1} parent=63 // pred_fallthru
          _
        // Predicated region
        $region77: #{tpu_custom_call.1} parent=63 // pred_check
          %p412 = pneg %p240
        $region78: #{tpu_custom_call.1} parent=63 // pred_check_branch
          %414 = sbr.rel (%p412) target = $region80
        $region79: #{tpu_custom_call.1} parent=63 // pred_region
          %415 = dma.done [#allocation9], 2048
        $region80: #{tpu_custom_call.1} parent=63 // pred_fallthru
          _
        %s416 = sand.u32 %s38, 1
        %s417 = scalar_lea.sflag [#allocation3], %s416
        %s418 = sand.u32 %s38, 1
        %s419 = smul.addr %s418, 384
        %s420 = scalar_lea.vmem [#allocation2], %s419
        %p421 = pneg %p51
        %p422 = pneg %p48
        %p423 = pneg %p72
        %p424 = pneg %p69
        %p425 = pneg %p93
        %p426 = pneg %p90
        %p427 = pneg %p114
        %p428 = pneg %p111
        %p429 = pneg %p135
        %p430 = pneg %p132
        %p431 = pneg %p156
        %p432 = pneg %p153
        %p433 = pneg %p177
        %p434 = pneg %p174
        %p435 = pneg %p198
        %p436 = pneg %p195
        %p437 = pneg %p219
        %p438 = pneg %p216
        %p439 = pneg %p240
        %p440 = pneg %p237
        %p441 = pneg %p261
        %p442 = pneg %p258
        %p443 = pneg %p287
        %p444 = pneg %p284
        %s445 = sand.u32 %s274, 1
        %s446 = scalar_lea.sflag [#allocation4], %s445
        %s447 = sand.u32 %s274, 1
        %s448 = smul.addr %s447, 128
        %s449 = scalar_lea.vmem [#allocation10], %s448
        %s450 = smul.u32 16, %s30
        %s451 = smul.u32 16, %s30
        %v452 = vld [vmem:[%s399] sm:$0xff]
        %v453 = vld [vmem:[%s399 + $0x8] sm:$0xff]
        %v454 = vld [vmem:[%s399 + $0x10] sm:$0xff]
        %v455 = vld [vmem:[%s399 + $0x18] sm:$0xff]
        %v456 = vld [vmem:[%s399 + $0x20] sm:$0xff]
        %v457 = vld [vmem:[%s399 + $0x28] sm:$0xff]
        %v458 = vld [vmem:[%s399 + $0x30] sm:$0xff]
        %v459 = vld [vmem:[%s399 + $0x38] sm:$0xff]
        %v460 = vld [vmem:[%s399 + $0x40] sm:$0xff]
        %v461 = vld [vmem:[%s399 + $0x48] sm:$0xff]
        %v462 = vld [vmem:[%s399 + $0x50] sm:$0xff]
        %v463 = vld [vmem:[%s399 + $0x58] sm:$0xff]
        %v464 = vld [vmem:[%s399 + $0x60] sm:$0xff]
        %v465 = vld [vmem:[%s399 + $0x68] sm:$0xff]
        %v466 = vld [vmem:[%s399 + $0x70] sm:$0xff]
        %v467 = vld [vmem:[%s399 + $0x78] sm:$0xff]
        %v468 = vld [vmem:[%s399 + $0x80] sm:$0xff]
        %v469 = vld [vmem:[%s399 + $0x88] sm:$0xff]
        %v470 = vld [vmem:[%s399 + $0x90] sm:$0xff]
        %v471 = vld [vmem:[%s399 + $0x98] sm:$0xff]
        %v472 = vld [vmem:[%s399 + $0xa0] sm:$0xff]
        %v473 = vld [vmem:[%s399 + $0xa8] sm:$0xff]
        %v474 = vld [vmem:[%s399 + $0xb0] sm:$0xff]
        %v475 = vld [vmem:[%s399 + $0xb8] sm:$0xff]
        %v476 = vld [vmem:[%s399 + $0xc0] sm:$0xff]
        %v477 = vld [vmem:[%s399 + $0xc8] sm:$0xff]
        %v478 = vld [vmem:[%s399 + $0xd0] sm:$0xff]
        %v479 = vld [vmem:[%s399 + $0xd8] sm:$0xff]
        %v480 = vld [vmem:[%s399 + $0xe0] sm:$0xff]
        %v481 = vld [vmem:[%s399 + $0xe8] sm:$0xff]
        %v482 = vld [vmem:[%s399 + $0xf0] sm:$0xff]
        %v483 = vld [vmem:[%s399 + $0xf8] sm:$0xff]
        %v484 = vld [vmem:[%s399 + $0x100] sm:$0xff]
        %v485 = vld [vmem:[%s399 + $0x108] sm:$0xff]
        %v486 = vld [vmem:[%s399 + $0x110] sm:$0xff]
        %v487 = vld [vmem:[%s399 + $0x118] sm:$0xff]
        %v488 = vld [vmem:[%s399 + $0x120] sm:$0xff]
        %v489 = vld [vmem:[%s399 + $0x128] sm:$0xff]
        %v490 = vld [vmem:[%s399 + $0x130] sm:$0xff]
        %v491 = vld [vmem:[%s399 + $0x138] sm:$0xff]
        %v492 = vld [vmem:[%s399 + $0x140] sm:$0xff]
        %v493 = vld [vmem:[%s399 + $0x148] sm:$0xff]
        %v494 = vld [vmem:[%s399 + $0x150] sm:$0xff]
        %v495 = vld [vmem:[%s399 + $0x158] sm:$0xff]
        %v496 = vld [vmem:[%s399 + $0x160] sm:$0xff]
        %v497 = vld [vmem:[%s399 + $0x168] sm:$0xff]
        %v498 = vld [vmem:[%s399 + $0x170] sm:$0xff]
        %v499 = vld [vmem:[%s399 + $0x178] sm:$0xff]
        %v500 = vld [vmem:[#allocation5] sm:$0xff]
        %v501 = vld [vmem:[#allocation5 + $0x8] sm:$0xff]
        %v502 = vld [vmem:[#allocation5 + $0x10] sm:$0xff]
        %v503 = vld [vmem:[#allocation5 + $0x18] sm:$0xff]
        %v504 = vld [vmem:[#allocation5 + $0x20] sm:$0xff]
        %v505 = vld [vmem:[#allocation5 + $0x28] sm:$0xff]
        %v506 = vld [vmem:[#allocation5 + $0x30] sm:$0xff]
        %v507 = vld [vmem:[#allocation5 + $0x38] sm:$0xff]
        %v508 = vld [vmem:[#allocation5 + $0x40] sm:$0xff]
        %v509 = vld [vmem:[#allocation5 + $0x48] sm:$0xff]
        %v510 = vld [vmem:[#allocation5 + $0x50] sm:$0xff]
        %v511 = vld [vmem:[#allocation5 + $0x58] sm:$0xff]
        %v512 = vld [vmem:[#allocation5 + $0x60] sm:$0xff]
        %v513 = vld [vmem:[#allocation5 + $0x68] sm:$0xff]
        %v514 = vld [vmem:[#allocation5 + $0x70] sm:$0xff]
        %v515 = vld [vmem:[#allocation5 + $0x78] sm:$0xff]
        %v516 = vld [vmem:[#allocation5 + $0x80] sm:$0xff]
        %v517 = vld [vmem:[#allocation5 + $0x88] sm:$0xff]
        %v518 = vld [vmem:[#allocation5 + $0x90] sm:$0xff]
        %v519 = vld [vmem:[#allocation5 + $0x98] sm:$0xff]
        %v520 = vld [vmem:[#allocation5 + $0xa0] sm:$0xff]
        %v521 = vld [vmem:[#allocation5 + $0xa8] sm:$0xff]
        %v522 = vld [vmem:[#allocation5 + $0xb0] sm:$0xff]
        %v523 = vld [vmem:[#allocation5 + $0xb8] sm:$0xff]
        %v524 = vld [vmem:[#allocation5 + $0xc0] sm:$0xff]
        %v525 = vld [vmem:[#allocation5 + $0xc8] sm:$0xff]
        %v526 = vld [vmem:[#allocation5 + $0xd0] sm:$0xff]
        %v527 = vld [vmem:[#allocation5 + $0xd8] sm:$0xff]
        %v528 = vld [vmem:[#allocation5 + $0xe0] sm:$0xff]
        %v529 = vld [vmem:[#allocation5 + $0xe8] sm:$0xff]
        %v530 = vld [vmem:[#allocation5 + $0xf0] sm:$0xff]
        %v531 = vld [vmem:[#allocation5 + $0xf8] sm:$0xff]
        %v532 = vld [vmem:[#allocation5 + $0x100] sm:$0xff]
        %v533 = vld [vmem:[#allocation5 + $0x108] sm:$0xff]
        %v534 = vld [vmem:[#allocation5 + $0x110] sm:$0xff]
        %v535 = vld [vmem:[#allocation5 + $0x118] sm:$0xff]
        %v536 = vld [vmem:[#allocation5 + $0x120] sm:$0xff]
        %v537 = vld [vmem:[#allocation5 + $0x128] sm:$0xff]
        %v538 = vld [vmem:[#allocation5 + $0x130] sm:$0xff]
        %v539 = vld [vmem:[#allocation5 + $0x138] sm:$0xff]
        %v540 = vld [vmem:[#allocation5 + $0x140] sm:$0xff]
        %v541 = vld [vmem:[#allocation5 + $0x148] sm:$0xff]
        %v542 = vld [vmem:[#allocation5 + $0x150] sm:$0xff]
        %v543 = vld [vmem:[#allocation5 + $0x158] sm:$0xff]
        %v544 = vld [vmem:[#allocation5 + $0x160] sm:$0xff]
        %v545 = vld [vmem:[#allocation5 + $0x168] sm:$0xff]
        %v546 = vld [vmem:[#allocation5 + $0x170] sm:$0xff]
        %v547 = vld [vmem:[#allocation5 + $0x178] sm:$0xff]
        %v548 = vld [vmem:[%s2] sm:$0x1]
        %v550 = vlaneseq
        %v551 = vshrl.u32 %v550, 7
        %v552 = vsub.s32 0, %v551
        %v553 = vrot.slane %v548, %v552
        %555 = vmatprep.subr.mxu0 0.0
        %556 = vmatpush1.msra.mxu0 %v500
        %557 = vmatprep.subr.mxu0 0.0
        %558 = vmatpush1.msra.mxu0 %v501
        %559 = vmatprep.subr.mxu0 0.0
        %560 = vmatpush1.msra.mxu0 %v502
        %561 = vmatprep.subr.mxu0 0.0
        %562 = vmatpush1.msra.mxu0 %v503
        %563 = vmatprep.subr.mxu0 0.0
        %564 = vmatpush1.msra.mxu0 %v504
        %565 = vmatprep.subr.mxu0 0.0
        %566 = vmatpush1.msra.mxu0 %v505
        %567 = vmatprep.subr.mxu0 0.0
        %568 = vmatpush1.msra.mxu0 %v506
        %569 = vmatprep.subr.mxu0 0.0
        %570 = vmatpush1.msra.mxu0 %v507
        %571 = vmatprep.subr.mxu0 0.0
        %572 = vmatpush1.msra.mxu0 %v508
        %573 = vmatprep.subr.mxu0 0.0
        %574 = vmatpush1.msra.mxu0 %v509
        %575 = vmatprep.subr.mxu0 0.0
        %576 = vmatpush1.msra.mxu0 %v510
        %577 = vmatprep.subr.mxu0 0.0
        %578 = vmatpush1.msra.mxu0 %v511
        %579 = vmatprep.subr.mxu0 0.0
        %580 = vmatpush1.msra.mxu0 %v512
        %581 = vmatprep.subr.mxu0 0.0
        %582 = vmatpush1.msra.mxu0 %v513
        %583 = vmatprep.subr.mxu0 0.0
        %584 = vmatpush1.msra.mxu0 %v514
        %585 = vmatprep.subr.mxu0 0.0
        %586 = vmatpush1.msra.mxu0 %v515
        %587 = vmatprep.subr.mxu0 0.0
        %588 = vmatpush1.msra.mxu0 %v516
        %589 = vmatprep.subr.mxu0 0.0
        %590 = vmatpush1.msra.mxu0 %v517
        %591 = vmatprep.subr.mxu0 0.0
        %592 = vmatpush1.msra.mxu0 %v518
        %593 = vmatprep.subr.mxu0 0.0
        %594 = vmatpush1.msra.mxu0 %v519
        %595 = vmatprep.subr.mxu0 0.0
        %596 = vmatpush1.msra.mxu0 %v520
        %597 = vmatprep.subr.mxu0 0.0
        %598 = vmatpush1.msra.mxu0 %v521
        %599 = vmatprep.subr.mxu0 0.0
        %600 = vmatpush1.msra.mxu0 %v522
        %601 = vmatprep.subr.mxu0 0.0
        %602 = vmatpush1.msra.mxu0 %v523
        %603 = vmatprep.subr.mxu0 0.0
        %604 = vmatpush1.msra.mxu0 %v524
        %605 = vmatprep.subr.mxu0 0.0
        %606 = vmatpush1.msra.mxu0 %v525
        %607 = vmatprep.subr.mxu0 0.0
        %608 = vmatpush1.msra.mxu0 %v526
        %609 = vmatprep.subr.mxu0 0.0
        %610 = vmatpush1.msra.mxu0 %v527
        %611 = vmatprep.subr.mxu0 0.0
        %612 = vmatpush1.msra.mxu0 %v528
        %613 = vmatprep.subr.mxu0 0.0
        %614 = vmatpush1.msra.mxu0 %v529
        %615 = vmatprep.subr.mxu0 0.0
        %616 = vmatpush1.msra.mxu0 %v530
        %617 = vmatprep.subr.mxu0 0.0
        %618 = vmatpush1.msra.mxu0 %v531
        %619 = vmatprep.mubr.f32.mxu0 %v453
        %620 = vmatmul.mubr.f32.gmra.mrb[0].mxu0 %v452
        %v621 = vpop.f32.mrb[0].mxu0
        %v622 = vadd.f32 %v553, %v621
        %v623 = vpop.f32.mrb[0].mxu0
        %624 = vmatprep.mubr.f32.mxu0 %v456
        %625 = vmatmul.mubr.f32.gmra.mrb[0].mxu0 %v455
        %v626 = vpop.f32.mrb[0].mxu0
        %v627 = vadd.f32 %v553, %v626
        %v628 = vpop.f32.mrb[0].mxu0
        %629 = vmatprep.mubr.f32.mxu0 %v459
        %630 = vmatmul.mubr.f32.gmra.mrb[0].mxu0 %v458
        %v631 = vpop.f32.mrb[0].mxu0
        %v632 = vadd.f32 %v553, %v631
        %v633 = vpop.f32.mrb[0].mxu0
        %634 = vmatprep.mubr.f32.mxu0 %v462
        %635 = vmatmul.mubr.f32.gmra.mrb[0].mxu0 %v461
        %v636 = vpop.f32.mrb[0].mxu0
        %v637 = vadd.f32 %v553, %v636
        %v638 = vpop.f32.mrb[0].mxu0
        %639 = vmatprep.mubr.f32.mxu0 %v465
        %640 = vmatmul.mubr.f32.gmra.mrb[0].mxu0 %v464
        %v641 = vpop.f32.mrb[0].mxu0
        %v642 = vadd.f32 %v553, %v641
        %v643 = vpop.f32.mrb[0].mxu0
        %644 = vmatprep.mubr.f32.mxu0 %v468
        %645 = vmatmul.mubr.f32.gmra.mrb[0].mxu0 %v467
        %v646 = vpop.f32.mrb[0].mxu0
        %v647 = vadd.f32 %v553, %v646
        %v648 = vpop.f32.mrb[0].mxu0
        %649 = vmatprep.mubr.f32.mxu0 %v471
        %650 = vmatmul.mubr.f32.gmra.mrb[0].mxu0 %v470
        %v651 = vpop.f32.mrb[0].mxu0
        %v652 = vadd.f32 %v553, %v651
        %v653 = vpop.f32.mrb[0].mxu0
        %654 = vmatprep.mubr.f32.mxu0 %v474
        %655 = vmatmul.mubr.f32.gmra.mrb[0].mxu0 %v473
        %v656 = vpop.f32.mrb[0].mxu0
        %v657 = vadd.f32 %v553, %v656
        %v658 = vpop.f32.mrb[0].mxu0
        %659 = vmatprep.mubr.f32.mxu0 %v477
        %660 = vmatmul.mubr.f32.gmra.mrb[0].mxu0 %v476
        %v661 = vpop.f32.mrb[0].mxu0
        %v662 = vadd.f32 %v553, %v661
        %v663 = vpop.f32.mrb[0].mxu0
        %664 = vmatprep.mubr.f32.mxu0 %v480
        %665 = vmatmul.mubr.f32.gmra.mrb[0].mxu0 %v479
        %v666 = vpop.f32.mrb[0].mxu0
        %v667 = vadd.f32 %v553, %v666
        %v668 = vpop.f32.mrb[0].mxu0
        %669 = vmatprep.mubr.f32.mxu0 %v483
        %670 = vmatmul.mubr.f32.gmra.mrb[0].mxu0 %v482
        %v671 = vpop.f32.mrb[0].mxu0
        %v672 = vadd.f32 %v553, %v671
        %v673 = vpop.f32.mrb[0].mxu0
        %674 = vmatprep.mubr.f32.mxu0 %v486
        %675 = vmatmul.mubr.f32.gmra.mrb[0].mxu0 %v485
        %v676 = vpop.f32.mrb[0].mxu0
        %v677 = vadd.f32 %v553, %v676
        %v678 = vpop.f32.mrb[0].mxu0
        %679 = vmatprep.mubr.f32.mxu0 %v489
        %680 = vmatmul.mubr.f32.gmra.mrb[0].mxu0 %v488
        %v681 = vpop.f32.mrb[0].mxu0
        %v682 = vadd.f32 %v553, %v681
        %v683 = vpop.f32.mrb[0].mxu0
        %684 = vmatprep.mubr.f32.mxu0 %v492
        %685 = vmatmul.mubr.f32.gmra.mrb[0].mxu0 %v491
        %v686 = vpop.f32.mrb[0].mxu0
        %v687 = vadd.f32 %v553, %v686
        %v688 = vpop.f32.mrb[0].mxu0
        %689 = vmatprep.mubr.f32.mxu0 %v495
        %690 = vmatmul.mubr.f32.gmra.mrb[0].mxu0 %v494
        %v691 = vpop.f32.mrb[0].mxu0
        %v692 = vadd.f32 %v553, %v691
        %v693 = vpop.f32.mrb[0].mxu0
        %694 = vmatprep.mubr.f32.mxu0 %v498
        %695 = vmatmul.mubr.f32.gmra.mrb[0].mxu0 %v497
        %v696 = vpop.f32.mrb[0].mxu0
        %v697 = vadd.f32 %v553, %v696
        %v698 = vpop.f32.mrb[0].mxu0
        %699 = vdwg.mxu0
        %700 = vmatprep.subr.mxu0 0.0
        %701 = vmatpush1.msra.mxu0 %v532
        %702 = vmatprep.subr.mxu0 0.0
        %703 = vmatpush1.msra.mxu0 %v533
        %704 = vmatprep.subr.mxu0 0.0
        %705 = vmatpush1.msra.mxu0 %v534
        %706 = vmatprep.subr.mxu0 0.0
        %707 = vmatpush1.msra.mxu0 %v535
        %708 = vmatprep.subr.mxu0 0.0
        %709 = vmatpush1.msra.mxu0 %v536
        %710 = vmatprep.subr.mxu0 0.0
        %711 = vmatpush1.msra.mxu0 %v537
        %712 = vmatprep.subr.mxu0 0.0
        %713 = vmatpush1.msra.mxu0 %v538
        %714 = vmatprep.subr.mxu0 0.0
        %715 = vmatpush1.msra.mxu0 %v539
        %716 = vmatprep.subr.mxu0 0.0
        %717 = vmatpush1.msra.mxu0 %v540
        %718 = vmatprep.subr.mxu0 0.0
        %719 = vmatpush1.msra.mxu0 %v541
        %720 = vmatprep.subr.mxu0 0.0
        %721 = vmatpush1.msra.mxu0 %v542
        %722 = vmatprep.subr.mxu0 0.0
        %723 = vmatpush1.msra.mxu0 %v543
        %724 = vmatprep.subr.mxu0 0.0
        %725 = vmatpush1.msra.mxu0 %v544
        %726 = vmatprep.subr.mxu0 0.0
        %727 = vmatpush1.msra.mxu0 %v545
        %728 = vmatprep.subr.mxu0 0.0
        %729 = vmatpush1.msra.mxu0 %v546
        %730 = vmatprep.subr.mxu0 0.0
        %731 = vmatpush1.msra.mxu0 %v547
        %732 = vmatprep.subr.mxu0 0.0
        %733 = vmatpush1.msra.mxu0 0.0
        %734 = vmatprep.subr.mxu0 0.0
        %735 = vmatpush1.msra.mxu0 0.0
        %736 = vmatprep.subr.mxu0 0.0
        %737 = vmatpush1.msra.mxu0 0.0
        %738 = vmatprep.subr.mxu0 0.0
        %739 = vmatpush1.msra.mxu0 0.0
        %740 = vmatprep.subr.mxu0 0.0
        %741 = vmatpush1.msra.mxu0 0.0
        %742 = vmatprep.subr.mxu0 0.0
        %743 = vmatpush1.msra.mxu0 0.0
        %744 = vmatprep.subr.mxu0 0.0
        %745 = vmatpush1.msra.mxu0 0.0
        %746 = vmatprep.subr.mxu0 0.0
        %747 = vmatpush1.msra.mxu0 0.0
        %748 = vmatprep.subr.mxu0 0.0
        %749 = vmatpush1.msra.mxu0 0.0
        %750 = vmatprep.subr.mxu0 0.0
        %751 = vmatpush1.msra.mxu0 0.0
        %752 = vmatprep.subr.mxu0 0.0
        %753 = vmatpush1.msra.mxu0 0.0
        %754 = vmatprep.subr.mxu0 0.0
        %755 = vmatpush1.msra.mxu0 0.0
        %756 = vmatprep.subr.mxu0 0.0
        %757 = vmatpush1.msra.mxu0 0.0
        %758 = vmatprep.subr.mxu0 0.0
        %759 = vmatpush1.msra.mxu0 0.0
        %760 = vmatprep.subr.mxu0 0.0
        %761 = vmatpush1.msra.mxu0 0.0
        %762 = vmatprep.subr.mxu0 0.0
        %763 = vmatpush1.msra.mxu0 0.0
        %764 = vmatprep.mubr.f32.mxu0 0.0
        %765 = vmatmul.mubr.f32.gmra.mrb[0].mxu0 %v454
        %v766 = vpop.f32.mrb[0].mxu0
        %v767 = vadd.f32 %v622, %v766
        %v768 = vpop.f32.mrb[0].mxu0
        %769 = vmatprep.mubr.f32.mxu0 0.0
        %770 = vmatmul.mubr.f32.gmra.mrb[0].mxu0 %v457
        %v771 = vpop.f32.mrb[0].mxu0
        %v772 = vadd.f32 %v627, %v771
        %v773 = vpop.f32.mrb[0].mxu0
        %774 = vmatprep.mubr.f32.mxu0 0.0
        %775 = vmatmul.mubr.f32.gmra.mrb[0].mxu0 %v460
        %v776 = vpop.f32.mrb[0].mxu0
        %v777 = vadd.f32 %v632, %v776
        %v778 = vpop.f32.mrb[0].mxu0
        %779 = vmatprep.mubr.f32.mxu0 0.0
        %780 = vmatmul.mubr.f32.gmra.mrb[0].mxu0 %v463
        %v781 = vpop.f32.mrb[0].mxu0
        %v782 = vadd.f32 %v637, %v781
        %v783 = vpop.f32.mrb[0].mxu0
        %784 = vmatprep.mubr.f32.mxu0 0.0
        %785 = vmatmul.mubr.f32.gmra.mrb[0].mxu0 %v466
        %v786 = vpop.f32.mrb[0].mxu0
        %v787 = vadd.f32 %v642, %v786
        %v788 = vpop.f32.mrb[0].mxu0
        %789 = vmatprep.mubr.f32.mxu0 0.0
        %790 = vmatmul.mubr.f32.gmra.mrb[0].mxu0 %v469
        %v791 = vpop.f32.mrb[0].mxu0
        %v792 = vadd.f32 %v647, %v791
        %v793 = vpop.f32.mrb[0].mxu0
        %794 = vmatprep.mubr.f32.mxu0 0.0
        %795 = vmatmul.mubr.f32.gmra.mrb[0].mxu0 %v472
        %v796 = vpop.f32.mrb[0].mxu0
        %v797 = vadd.f32 %v652, %v796
        %v798 = vpop.f32.mrb[0].mxu0
        %799 = vmatprep.mubr.f32.mxu0 0.0
        %800 = vmatmul.mubr.f32.gmra.mrb[0].mxu0 %v475
        %v801 = vpop.f32.mrb[0].mxu0
        %v802 = vadd.f32 %v657, %v801
        %v803 = vpop.f32.mrb[0].mxu0
        %804 = vmatprep.mubr.f32.mxu0 0.0
        %805 = vmatmul.mubr.f32.gmra.mrb[0].mxu0 %v478
        %v806 = vpop.f32.mrb[0].mxu0
        %v807 = vadd.f32 %v662, %v806
        %v808 = vpop.f32.mrb[0].mxu0
        %809 = vmatprep.mubr.f32.mxu0 0.0
        %810 = vmatmul.mubr.f32.gmra.mrb[0].mxu0 %v481
        %v811 = vpop.f32.mrb[0].mxu0
        %v812 = vadd.f32 %v667, %v811
        %v813 = vpop.f32.mrb[0].mxu0
        %814 = vmatprep.mubr.f32.mxu0 0.0
        %815 = vmatmul.mubr.f32.gmra.mrb[0].mxu0 %v484
        %v816 = vpop.f32.mrb[0].mxu0
        %v817 = vadd.f32 %v672, %v816
        %v818 = vpop.f32.mrb[0].mxu0
        %819 = vmatprep.mubr.f32.mxu0 0.0
        %820 = vmatmul.mubr.f32.gmra.mrb[0].mxu0 %v487
        %v821 = vpop.f32.mrb[0].mxu0
        %v822 = vadd.f32 %v677, %v821
        %v823 = vpop.f32.mrb[0].mxu0
        %824 = vmatprep.mubr.f32.mxu0 0.0
        %825 = vmatmul.mubr.f32.gmra.mrb[0].mxu0 %v490
        %v826 = vpop.f32.mrb[0].mxu0
        %v827 = vadd.f32 %v682, %v826
        %v828 = vpop.f32.mrb[0].mxu0
        %829 = vmatprep.mubr.f32.mxu0 0.0
        %830 = vmatmul.mubr.f32.gmra.mrb[0].mxu0 %v493
        %v831 = vpop.f32.mrb[0].mxu0
        %v832 = vadd.f32 %v687, %v831
        %v833 = vpop.f32.mrb[0].mxu0
        %834 = vmatprep.mubr.f32.mxu0 0.0
        %835 = vmatmul.mubr.f32.gmra.mrb[0].mxu0 %v496
        %v836 = vpop.f32.mrb[0].mxu0
        %v837 = vadd.f32 %v692, %v836
        %v838 = vpop.f32.mrb[0].mxu0
        %839 = vmatprep.mubr.f32.mxu0 0.0
        %840 = vmatmul.mubr.f32.gmra.mrb[0].mxu0 %v499
        %v841 = vpop.f32.mrb[0].mxu0
        %v842 = vadd.f32 %v697, %v841
        %v843 = vpop.f32.mrb[0].mxu0
        %844 = vdwg.mxu0
        %v845 = vmul.f32 %v767, 0.5
        %v846 = vmul.f32 %v772, 0.5
        %v847 = vmul.f32 %v777, 0.5
        %v848 = vmul.f32 %v782, 0.5
        %v849 = vmul.f32 %v787, 0.5
        %v850 = vmul.f32 %v792, 0.5
        %v851 = vmul.f32 %v797, 0.5
        %v852 = vmul.f32 %v802, 0.5
        %v853 = vmul.f32 %v807, 0.5
        %v854 = vmul.f32 %v812, 0.5
        %v855 = vmul.f32 %v817, 0.5
        %v856 = vmul.f32 %v822, 0.5
        %v857 = vmul.f32 %v827, 0.5
        %v858 = vmul.f32 %v832, 0.5
        %v859 = vmul.f32 %v837, 0.5
        %v860 = vmul.f32 %v842, 0.5
        %v861 = vmul.f32 %v767, 0.044715
        %v862 = vmul.f32 %v772, 0.044715
        %v863 = vmul.f32 %v777, 0.044715
        %v864 = vmul.f32 %v782, 0.044715
        %v865 = vmul.f32 %v787, 0.044715
        %v866 = vmul.f32 %v792, 0.044715
        %v867 = vmul.f32 %v797, 0.044715
        %v868 = vmul.f32 %v802, 0.044715
        %v869 = vmul.f32 %v807, 0.044715
        %v870 = vmul.f32 %v812, 0.044715
        %v871 = vmul.f32 %v817, 0.044715
        %v872 = vmul.f32 %v822, 0.044715
        %v873 = vmul.f32 %v827, 0.044715
        %v874 = vmul.f32 %v832, 0.044715
        %v875 = vmul.f32 %v837, 0.044715
        %v876 = vmul.f32 %v842, 0.044715
        %v877 = vmul.f32 %v861, %v767
        %v878 = vmul.f32 %v862, %v772
        %v879 = vmul.f32 %v863, %v777
        %v880 = vmul.f32 %v864, %v782
        %v881 = vmul.f32 %v865, %v787
        %v882 = vmul.f32 %v866, %v792
        %v883 = vmul.f32 %v867, %v797
        %v884 = vmul.f32 %v868, %v802
        %v885 = vmul.f32 %v869, %v807
        %v886 = vmul.f32 %v870, %v812
        %v887 = vmul.f32 %v871, %v817
        %v888 = vmul.f32 %v872, %v822
        %v889 = vmul.f32 %v873, %v827
        %v890 = vmul.f32 %v874, %v832
        %v891 = vmul.f32 %v875, %v837
        %v892 = vmul.f32 %v876, %v842
        %v893 = vmul.f32 %v877, %v767
        %v894 = vmul.f32 %v878, %v772
        %v895 = vmul.f32 %v879, %v777
        %v896 = vmul.f32 %v880, %v782
        %v897 = vmul.f32 %v881, %v787
        %v898 = vmul.f32 %v882, %v792
        %v899 = vmul.f32 %v883, %v797
        %v900 = vmul.f32 %v884, %v802
        %v901 = vmul.f32 %v885, %v807
        %v902 = vmul.f32 %v886, %v812
        %v903 = vmul.f32 %v887, %v817
        %v904 = vmul.f32 %v888, %v822
        %v905 = vmul.f32 %v889, %v827
        %v906 = vmul.f32 %v890, %v832
        %v907 = vmul.f32 %v891, %v837
        %v908 = vmul.f32 %v892, %v842
        %v909 = vadd.f32 %v767, %v893
        %v910 = vadd.f32 %v772, %v894
        %v911 = vadd.f32 %v777, %v895
        %v912 = vadd.f32 %v782, %v896
        %v913 = vadd.f32 %v787, %v897
        %v914 = vadd.f32 %v792, %v898
        %v915 = vadd.f32 %v797, %v899
        %v916 = vadd.f32 %v802, %v900
        %v917 = vadd.f32 %v807, %v901
        %v918 = vadd.f32 %v812, %v902
        %v919 = vadd.f32 %v817, %v903
        %v920 = vadd.f32 %v822, %v904
        %v921 = vadd.f32 %v827, %v905
        %v922 = vadd.f32 %v832, %v906
        %v923 = vadd.f32 %v837, %v907
        %v924 = vadd.f32 %v842, %v908
        %v925 = vmul.f32 %v909, 0.7978846
        %v926 = vmul.f32 %v910, 0.7978846
        %v927 = vmul.f32 %v911, 0.7978846
        %v928 = vmul.f32 %v912, 0.7978846
        %v929 = vmul.f32 %v913, 0.7978846
        %v930 = vmul.f32 %v914, 0.7978846
        %v931 = vmul.f32 %v915, 0.7978846
        %v932 = vmul.f32 %v916, 0.7978846
        %v933 = vmul.f32 %v917, 0.7978846
        %v934 = vmul.f32 %v918, 0.7978846
        %v935 = vmul.f32 %v919, 0.7978846
        %v936 = vmul.f32 %v920, 0.7978846
        %v937 = vmul.f32 %v921, 0.7978846
        %v938 = vmul.f32 %v922, 0.7978846
        %v939 = vmul.f32 %v923, 0.7978846
        %v940 = vmul.f32 %v924, 0.7978846
        %v941 = vtanh.pop %v925
        %v942 = vtanh.pop %v926
        %v943 = vtanh.pop %v927
        %v944 = vtanh.pop %v928
        %v945 = vtanh.pop %v929
        %v946 = vtanh.pop %v930
        %v947 = vtanh.pop %v931
        %v948 = vtanh.pop %v932
        %v949 = vtanh.pop %v933
        %v950 = vtanh.pop %v934
        %v951 = vtanh.pop %v935
        %v952 = vtanh.pop %v936
        %v953 = vtanh.pop %v937
        %v954 = vtanh.pop %v938
        %v955 = vtanh.pop %v939
        %v956 = vtanh.pop %v940
        %v957 = vadd.f32 %v941, 1.0
        %v958 = vadd.f32 %v942, 1.0
        %v959 = vadd.f32 %v943, 1.0
        %v960 = vadd.f32 %v944, 1.0
        %v961 = vadd.f32 %v945, 1.0
        %v962 = vadd.f32 %v946, 1.0
        %v963 = vadd.f32 %v947, 1.0
        %v964 = vadd.f32 %v948, 1.0
        %v965 = vadd.f32 %v949, 1.0
        %v966 = vadd.f32 %v950, 1.0
        %v967 = vadd.f32 %v951, 1.0
        %v968 = vadd.f32 %v952, 1.0
        %v969 = vadd.f32 %v953, 1.0
        %v970 = vadd.f32 %v954, 1.0
        %v971 = vadd.f32 %v955, 1.0
        %v972 = vadd.f32 %v956, 1.0
        %v973 = vmul.f32 %v845, %v957
        %v974 = vmul.f32 %v846, %v958
        %v975 = vmul.f32 %v847, %v959
        %v976 = vmul.f32 %v848, %v960
        %v977 = vmul.f32 %v849, %v961
        %v978 = vmul.f32 %v850, %v962
        %v979 = vmul.f32 %v851, %v963
        %v980 = vmul.f32 %v852, %v964
        %v981 = vmul.f32 %v853, %v965
        %v982 = vmul.f32 %v854, %v966
        %v983 = vmul.f32 %v855, %v967
        %v984 = vmul.f32 %v856, %v968
        %v985 = vmul.f32 %v857, %v969
        %v986 = vmul.f32 %v858, %v970
        %v987 = vmul.f32 %v859, %v971
        %v988 = vmul.f32 %v860, %v972
        %v989 = vld [vmem:[%s3] sm:$0x1]
        %v991 = vlaneseq
        %v992 = vshrl.u32 %v991, 7
        %v993 = vsub.s32 0, %v992
        %v994 = vrot.slane %v989, %v993
        %v996 = vmul.f32 %v973, %v994
        %v997 = vmul.f32 %v974, %v994
        %v998 = vmul.f32 %v975, %v994
        %v999 = vmul.f32 %v976, %v994
        %v1000 = vmul.f32 %v977, %v994
        %v1001 = vmul.f32 %v978, %v994
        %v1002 = vmul.f32 %v979, %v994
        %v1003 = vmul.f32 %v980, %v994
        %v1004 = vmul.f32 %v981, %v994
        %v1005 = vmul.f32 %v982, %v994
        %v1006 = vmul.f32 %v983, %v994
        %v1007 = vmul.f32 %v984, %v994
        %v1008 = vmul.f32 %v985, %v994
        %v1009 = vmul.f32 %v986, %v994
        %v1010 = vmul.f32 %v987, %v994
        %v1011 = vmul.f32 %v988, %v994
        %v1012 = vld [vmem:[%s4] sm:$0x1]
        %v1014 = vlaneseq
        %v1015 = vshrl.u32 %v1014, 7
        %v1016 = vsub.s32 0, %v1015
        %v1017 = vrot.slane %v1012, %v1016
        %v1019 = vadd.f32 %v996, %v1017
        %v1020 = vadd.f32 %v997, %v1017
        %v1021 = vadd.f32 %v998, %v1017
        %v1022 = vadd.f32 %v999, %v1017
        %v1023 = vadd.f32 %v1000, %v1017
        %v1024 = vadd.f32 %v1001, %v1017
        %v1025 = vadd.f32 %v1002, %v1017
        %v1026 = vadd.f32 %v1003, %v1017
        %v1027 = vadd.f32 %v1004, %v1017
        %v1028 = vadd.f32 %v1005, %v1017
        %v1029 = vadd.f32 %v1006, %v1017
        %v1030 = vadd.f32 %v1007, %v1017
        %v1031 = vadd.f32 %v1008, %v1017
        %v1032 = vadd.f32 %v1009, %v1017
        %v1033 = vadd.f32 %v1010, %v1017
        %v1034 = vadd.f32 %v1011, %v1017
        %v1035 = vld [vmem:[#allocation7] sm:$0xff]
        %v1036 = vld [vmem:[#allocation7 + $0x8] sm:$0xff]
        %v1037 = vld [vmem:[#allocation7 + $0x10] sm:$0xff]
        %v1038 = vld [vmem:[#allocation7 + $0x18] sm:$0xff]
        %v1039 = vld [vmem:[#allocation7 + $0x20] sm:$0xff]
        %v1040 = vld [vmem:[#allocation7 + $0x28] sm:$0xff]
        %v1041 = vld [vmem:[#allocation7 + $0x30] sm:$0xff]
        %v1042 = vld [vmem:[#allocation7 + $0x38] sm:$0xff]
        %v1043 = vld [vmem:[#allocation7 + $0x40] sm:$0xff]
        %v1044 = vld [vmem:[#allocation7 + $0x48] sm:$0xff]
        %v1045 = vld [vmem:[#allocation7 + $0x50] sm:$0xff]
        %v1046 = vld [vmem:[#allocation7 + $0x58] sm:$0xff]
        %v1047 = vld [vmem:[#allocation7 + $0x60] sm:$0xff]
        %v1048 = vld [vmem:[#allocation7 + $0x68] sm:$0xff]
        %v1049 = vld [vmem:[#allocation7 + $0x70] sm:$0xff]
        %v1050 = vld [vmem:[#allocation7 + $0x78] sm:$0xff]
        %v1051 = vld [vmem:[%s6] sm:$0x1]
        %v1053 = vlaneseq
        %v1054 = vshrl.u32 %v1053, 7
        %v1055 = vsub.s32 0, %v1054
        %v1056 = vrot.slane %v1051, %v1055
        %1058 = vmatprep.subr.mxu0 0.0
        %1059 = vmatpush1.msra.mxu0 %v1035
        %1060 = vmatprep.subr.mxu0 0.0
        %1061 = vmatpush1.msra.mxu0 %v1036
        %1062 = vmatprep.subr.mxu0 0.0
        %1063 = vmatpush1.msra.mxu0 %v1037
        %1064 = vmatprep.subr.mxu0 0.0
        %1065 = vmatpush1.msra.mxu0 %v1038
        %1066 = vmatprep.subr.mxu0 0.0
        %1067 = vmatpush1.msra.mxu0 %v1039
        %1068 = vmatprep.subr.mxu0 0.0
        %1069 = vmatpush1.msra.mxu0 %v1040
        %1070 = vmatprep.subr.mxu0 0.0
        %1071 = vmatpush1.msra.mxu0 %v1041
        %1072 = vmatprep.subr.mxu0 0.0
        %1073 = vmatpush1.msra.mxu0 %v1042
        %1074 = vmatprep.subr.mxu0 0.0
        %1075 = vmatpush1.msra.mxu0 %v1043
        %1076 = vmatprep.subr.mxu0 0.0
        %1077 = vmatpush1.msra.mxu0 %v1044
        %1078 = vmatprep.subr.mxu0 0.0
        %1079 = vmatpush1.msra.mxu0 %v1045
        %1080 = vmatprep.subr.mxu0 0.0
        %1081 = vmatpush1.msra.mxu0 %v1046
        %1082 = vmatprep.subr.mxu0 0.0
        %1083 = vmatpush1.msra.mxu0 %v1047
        %1084 = vmatprep.subr.mxu0 0.0
        %1085 = vmatpush1.msra.mxu0 %v1048
        %1086 = vmatprep.subr.mxu0 0.0
        %1087 = vmatpush1.msra.mxu0 %v1049
        %1088 = vmatprep.subr.mxu0 0.0
        %1089 = vmatpush1.msra.mxu0 %v1050
        %1090 = vmatprep.subr.mxu0 0.0
        %1091 = vmatpush1.msra.mxu0 0.0
        %1092 = vmatprep.subr.mxu0 0.0
        %1093 = vmatpush1.msra.mxu0 0.0
        %1094 = vmatprep.subr.mxu0 0.0
        %1095 = vmatpush1.msra.mxu0 0.0
        %1096 = vmatprep.subr.mxu0 0.0
        %1097 = vmatpush1.msra.mxu0 0.0
        %1098 = vmatprep.subr.mxu0 0.0
        %1099 = vmatpush1.msra.mxu0 0.0
        %1100 = vmatprep.subr.mxu0 0.0
        %1101 = vmatpush1.msra.mxu0 0.0
        %1102 = vmatprep.subr.mxu0 0.0
        %1103 = vmatpush1.msra.mxu0 0.0
        %1104 = vmatprep.subr.mxu0 0.0
        %1105 = vmatpush1.msra.mxu0 0.0
        %1106 = vmatprep.subr.mxu0 0.0
        %1107 = vmatpush1.msra.mxu0 0.0
        %1108 = vmatprep.subr.mxu0 0.0
        %1109 = vmatpush1.msra.mxu0 0.0
        %1110 = vmatprep.subr.mxu0 0.0
        %1111 = vmatpush1.msra.mxu0 0.0
        %1112 = vmatprep.subr.mxu0 0.0
        %1113 = vmatpush1.msra.mxu0 0.0
        %1114 = vmatprep.subr.mxu0 0.0
        %1115 = vmatpush1.msra.mxu0 0.0
        %1116 = vmatprep.subr.mxu0 0.0
        %1117 = vmatpush1.msra.mxu0 0.0
        %1118 = vmatprep.subr.mxu0 0.0
        %1119 = vmatpush1.msra.mxu0 0.0
        %1120 = vmatprep.subr.mxu0 0.0
        %1121 = vmatpush1.msra.mxu0 0.0
        %1122 = vmatprep.mubr.f32.mxu0 0.0
        %1123 = vmatmul.mubr.f32.gmra.mrb[0].mxu0 %v1019
        %v1124 = vpop.f32.mrb[0].mxu0
        %v1125 = vadd.f32 %v1056, %v1124
        %v1126 = vpop.f32.mrb[0].mxu0
        %1127 = vmatprep.mubr.f32.mxu0 0.0
        %1128 = vmatmul.mubr.f32.gmra.mrb[0].mxu0 %v1020
        %v1129 = vpop.f32.mrb[0].mxu0
        %v1130 = vadd.f32 %v1056, %v1129
        %v1131 = vpop.f32.mrb[0].mxu0
        %1132 = vmatprep.mubr.f32.mxu0 0.0
        %1133 = vmatmul.mubr.f32.gmra.mrb[0].mxu0 %v1021
        %v1134 = vpop.f32.mrb[0].mxu0
        %v1135 = vadd.f32 %v1056, %v1134
        %v1136 = vpop.f32.mrb[0].mxu0
        %1137 = vmatprep.mubr.f32.mxu0 0.0
        %1138 = vmatmul.mubr.f32.gmra.mrb[0].mxu0 %v1022
        %v1139 = vpop.f32.mrb[0].mxu0
        %v1140 = vadd.f32 %v1056, %v1139
        %v1141 = vpop.f32.mrb[0].mxu0
        %1142 = vmatprep.mubr.f32.mxu0 0.0
        %1143 = vmatmul.mubr.f32.gmra.mrb[0].mxu0 %v1023
        %v1144 = vpop.f32.mrb[0].mxu0
        %v1145 = vadd.f32 %v1056, %v1144
        %v1146 = vpop.f32.mrb[0].mxu0
        %1147 = vmatprep.mubr.f32.mxu0 0.0
        %1148 = vmatmul.mubr.f32.gmra.mrb[0].mxu0 %v1024
        %v1149 = vpop.f32.mrb[0].mxu0
        %v1150 = vadd.f32 %v1056, %v1149
        %v1151 = vpop.f32.mrb[0].mxu0
        %1152 = vmatprep.mubr.f32.mxu0 0.0
        %1153 = vmatmul.mubr.f32.gmra.mrb[0].mxu0 %v1025
        %v1154 = vpop.f32.mrb[0].mxu0
        %v1155 = vadd.f32 %v1056, %v1154
        %v1156 = vpop.f32.mrb[0].mxu0
        %1157 = vmatprep.mubr.f32.mxu0 0.0
        %1158 = vmatmul.mubr.f32.gmra.mrb[0].mxu0 %v1026
        %v1159 = vpop.f32.mrb[0].mxu0
        %v1160 = vadd.f32 %v1056, %v1159
        %v1161 = vpop.f32.mrb[0].mxu0
        %1162 = vmatprep.mubr.f32.mxu0 0.0
        %1163 = vmatmul.mubr.f32.gmra.mrb[0].mxu0 %v1027
        %v1164 = vpop.f32.mrb[0].mxu0
        %v1165 = vadd.f32 %v1056, %v1164
        %v1166 = vpop.f32.mrb[0].mxu0
        %1167 = vmatprep.mubr.f32.mxu0 0.0
        %1168 = vmatmul.mubr.f32.gmra.mrb[0].mxu0 %v1028
        %v1169 = vpop.f32.mrb[0].mxu0
        %v1170 = vadd.f32 %v1056, %v1169
        %v1171 = vpop.f32.mrb[0].mxu0
        %1172 = vmatprep.mubr.f32.mxu0 0.0
        %1173 = vmatmul.mubr.f32.gmra.mrb[0].mxu0 %v1029
        %v1174 = vpop.f32.mrb[0].mxu0
        %v1175 = vadd.f32 %v1056, %v1174
        %v1176 = vpop.f32.mrb[0].mxu0
        %1177 = vmatprep.mubr.f32.mxu0 0.0
        %1178 = vmatmul.mubr.f32.gmra.mrb[0].mxu0 %v1030
        %v1179 = vpop.f32.mrb[0].mxu0
        %v1180 = vadd.f32 %v1056, %v1179
        %v1181 = vpop.f32.mrb[0].mxu0
        %1182 = vmatprep.mubr.f32.mxu0 0.0
        %1183 = vmatmul.mubr.f32.gmra.mrb[0].mxu0 %v1031
        %v1184 = vpop.f32.mrb[0].mxu0
        %v1185 = vadd.f32 %v1056, %v1184
        %v1186 = vpop.f32.mrb[0].mxu0
        %1187 = vmatprep.mubr.f32.mxu0 0.0
        %1188 = vmatmul.mubr.f32.gmra.mrb[0].mxu0 %v1032
        %v1189 = vpop.f32.mrb[0].mxu0
        %v1190 = vadd.f32 %v1056, %v1189
        %v1191 = vpop.f32.mrb[0].mxu0
        %1192 = vmatprep.mubr.f32.mxu0 0.0
        %1193 = vmatmul.mubr.f32.gmra.mrb[0].mxu0 %v1033
        %v1194 = vpop.f32.mrb[0].mxu0
        %v1195 = vadd.f32 %v1056, %v1194
        %v1196 = vpop.f32.mrb[0].mxu0
        %1197 = vmatprep.mubr.f32.mxu0 0.0
        %1198 = vmatmul.mubr.f32.gmra.mrb[0].mxu0 %v1034
        %v1199 = vpop.f32.mrb[0].mxu0
        %v1200 = vadd.f32 %v1056, %v1199
        %v1201 = vpop.f32.mrb[0].mxu0
        %1202 = vdwg.mxu0
        %v1203 = vmul.f32 %v1125, 0.5
        %v1204 = vmul.f32 %v1130, 0.5
        %v1205 = vmul.f32 %v1135, 0.5
        %v1206 = vmul.f32 %v1140, 0.5
        %v1207 = vmul.f32 %v1145, 0.5
        %v1208 = vmul.f32 %v1150, 0.5
        %v1209 = vmul.f32 %v1155, 0.5
        %v1210 = vmul.f32 %v1160, 0.5
        %v1211 = vmul.f32 %v1165, 0.5
        %v1212 = vmul.f32 %v1170, 0.5
        %v1213 = vmul.f32 %v1175, 0.5
        %v1214 = vmul.f32 %v1180, 0.5
        %v1215 = vmul.f32 %v1185, 0.5
        %v1216 = vmul.f32 %v1190, 0.5
        %v1217 = vmul.f32 %v1195, 0.5
        %v1218 = vmul.f32 %v1200, 0.5
        %v1219 = vmul.f32 %v1125, 0.044715
        %v1220 = vmul.f32 %v1130, 0.044715
        %v1221 = vmul.f32 %v1135, 0.044715
        %v1222 = vmul.f32 %v1140, 0.044715
        %v1223 = vmul.f32 %v1145, 0.044715
        %v1224 = vmul.f32 %v1150, 0.044715
        %v1225 = vmul.f32 %v1155, 0.044715
        %v1226 = vmul.f32 %v1160, 0.044715
        %v1227 = vmul.f32 %v1165, 0.044715
        %v1228 = vmul.f32 %v1170, 0.044715
        %v1229 = vmul.f32 %v1175, 0.044715
        %v1230 = vmul.f32 %v1180, 0.044715
        %v1231 = vmul.f32 %v1185, 0.044715
        %v1232 = vmul.f32 %v1190, 0.044715
        %v1233 = vmul.f32 %v1195, 0.044715
        %v1234 = vmul.f32 %v1200, 0.044715
        %v1235 = vmul.f32 %v1219, %v1125
        %v1236 = vmul.f32 %v1220, %v1130
        %v1237 = vmul.f32 %v1221, %v1135
        %v1238 = vmul.f32 %v1222, %v1140
        %v1239 = vmul.f32 %v1223, %v1145
        %v1240 = vmul.f32 %v1224, %v1150
        %v1241 = vmul.f32 %v1225, %v1155
        %v1242 = vmul.f32 %v1226, %v1160
        %v1243 = vmul.f32 %v1227, %v1165
        %v1244 = vmul.f32 %v1228, %v1170
        %v1245 = vmul.f32 %v1229, %v1175
        %v1246 = vmul.f32 %v1230, %v1180
        %v1247 = vmul.f32 %v1231, %v1185
        %v1248 = vmul.f32 %v1232, %v1190
        %v1249 = vmul.f32 %v1233, %v1195
        %v1250 = vmul.f32 %v1234, %v1200
        %v1251 = vmul.f32 %v1235, %v1125
        %v1252 = vmul.f32 %v1236, %v1130
        %v1253 = vmul.f32 %v1237, %v1135
        %v1254 = vmul.f32 %v1238, %v1140
        %v1255 = vmul.f32 %v1239, %v1145
        %v1256 = vmul.f32 %v1240, %v1150
        %v1257 = vmul.f32 %v1241, %v1155
        %v1258 = vmul.f32 %v1242, %v1160
        %v1259 = vmul.f32 %v1243, %v1165
        %v1260 = vmul.f32 %v1244, %v1170
        %v1261 = vmul.f32 %v1245, %v1175
        %v1262 = vmul.f32 %v1246, %v1180
        %v1263 = vmul.f32 %v1247, %v1185
        %v1264 = vmul.f32 %v1248, %v1190
        %v1265 = vmul.f32 %v1249, %v1195
        %v1266 = vmul.f32 %v1250, %v1200
        %v1267 = vadd.f32 %v1125, %v1251
        %v1268 = vadd.f32 %v1130, %v1252
        %v1269 = vadd.f32 %v1135, %v1253
        %v1270 = vadd.f32 %v1140, %v1254
        %v1271 = vadd.f32 %v1145, %v1255
        %v1272 = vadd.f32 %v1150, %v1256
        %v1273 = vadd.f32 %v1155, %v1257
        %v1274 = vadd.f32 %v1160, %v1258
        %v1275 = vadd.f32 %v1165, %v1259
        %v1276 = vadd.f32 %v1170, %v1260
        %v1277 = vadd.f32 %v1175, %v1261
        %v1278 = vadd.f32 %v1180, %v1262
        %v1279 = vadd.f32 %v1185, %v1263
        %v1280 = vadd.f32 %v1190, %v1264
        %v1281 = vadd.f32 %v1195, %v1265
        %v1282 = vadd.f32 %v1200, %v1266
        %v1283 = vmul.f32 %v1267, 0.7978846
        %v1284 = vmul.f32 %v1268, 0.7978846
        %v1285 = vmul.f32 %v1269, 0.7978846
        %v1286 = vmul.f32 %v1270, 0.7978846
        %v1287 = vmul.f32 %v1271, 0.7978846
        %v1288 = vmul.f32 %v1272, 0.7978846
        %v1289 = vmul.f32 %v1273, 0.7978846
        %v1290 = vmul.f32 %v1274, 0.7978846
        %v1291 = vmul.f32 %v1275, 0.7978846
        %v1292 = vmul.f32 %v1276, 0.7978846
        %v1293 = vmul.f32 %v1277, 0.7978846
        %v1294 = vmul.f32 %v1278, 0.7978846
        %v1295 = vmul.f32 %v1279, 0.7978846
        %v1296 = vmul.f32 %v1280, 0.7978846
        %v1297 = vmul.f32 %v1281, 0.7978846
        %v1298 = vmul.f32 %v1282, 0.7978846
        %v1299 = vtanh.pop %v1283
        %v1300 = vtanh.pop %v1284
        %v1301 = vtanh.pop %v1285
        %v1302 = vtanh.pop %v1286
        %v1303 = vtanh.pop %v1287
        %v1304 = vtanh.pop %v1288
        %v1305 = vtanh.pop %v1289
        %v1306 = vtanh.pop %v1290
        %v1307 = vtanh.pop %v1291
        %v1308 = vtanh.pop %v1292
        %v1309 = vtanh.pop %v1293
        %v1310 = vtanh.pop %v1294
        %v1311 = vtanh.pop %v1295
        %v1312 = vtanh.pop %v1296
        %v1313 = vtanh.pop %v1297
        %v1314 = vtanh.pop %v1298
        %v1315 = vadd.f32 %v1299, 1.0
        %v1316 = vadd.f32 %v1300, 1.0
        %v1317 = vadd.f32 %v1301, 1.0
        %v1318 = vadd.f32 %v1302, 1.0
        %v1319 = vadd.f32 %v1303, 1.0
        %v1320 = vadd.f32 %v1304, 1.0
        %v1321 = vadd.f32 %v1305, 1.0
        %v1322 = vadd.f32 %v1306, 1.0
        %v1323 = vadd.f32 %v1307, 1.0
        %v1324 = vadd.f32 %v1308, 1.0
        %v1325 = vadd.f32 %v1309, 1.0
        %v1326 = vadd.f32 %v1310, 1.0
        %v1327 = vadd.f32 %v1311, 1.0
        %v1328 = vadd.f32 %v1312, 1.0
        %v1329 = vadd.f32 %v1313, 1.0
        %v1330 = vadd.f32 %v1314, 1.0
        %v1331 = vmul.f32 %v1203, %v1315
        %v1332 = vmul.f32 %v1204, %v1316
        %v1333 = vmul.f32 %v1205, %v1317
        %v1334 = vmul.f32 %v1206, %v1318
        %v1335 = vmul.f32 %v1207, %v1319
        %v1336 = vmul.f32 %v1208, %v1320
        %v1337 = vmul.f32 %v1209, %v1321
        %v1338 = vmul.f32 %v1210, %v1322
        %v1339 = vmul.f32 %v1211, %v1323
        %v1340 = vmul.f32 %v1212, %v1324
        %v1341 = vmul.f32 %v1213, %v1325
        %v1342 = vmul.f32 %v1214, %v1326
        %v1343 = vmul.f32 %v1215, %v1327
        %v1344 = vmul.f32 %v1216, %v1328
        %v1345 = vmul.f32 %v1217, %v1329
        %v1346 = vmul.f32 %v1218, %v1330
        %v1347 = vld [vmem:[%s7] sm:$0x1]
        %v1349 = vlaneseq
        %v1350 = vshrl.u32 %v1349, 7
        %v1351 = vsub.s32 0, %v1350
        %v1352 = vrot.slane %v1347, %v1351
        %v1354 = vmul.f32 %v1331, %v1352
        %v1355 = vmul.f32 %v1332, %v1352
        %v1356 = vmul.f32 %v1333, %v1352
        %v1357 = vmul.f32 %v1334, %v1352
        %v1358 = vmul.f32 %v1335, %v1352
        %v1359 = vmul.f32 %v1336, %v1352
        %v1360 = vmul.f32 %v1337, %v1352
        %v1361 = vmul.f32 %v1338, %v1352
        %v1362 = vmul.f32 %v1339, %v1352
        %v1363 = vmul.f32 %v1340, %v1352
        %v1364 = vmul.f32 %v1341, %v1352
        %v1365 = vmul.f32 %v1342, %v1352
        %v1366 = vmul.f32 %v1343, %v1352
        %v1367 = vmul.f32 %v1344, %v1352
        %v1368 = vmul.f32 %v1345, %v1352
        %v1369 = vmul.f32 %v1346, %v1352
        %v1370 = vld [vmem:[%s8] sm:$0x1]
        %v1372 = vlaneseq
        %v1373 = vshrl.u32 %v1372, 7
        %v1374 = vsub.s32 0, %v1373
        %v1375 = vrot.slane %v1370, %v1374
        %v1377 = vadd.f32 %v1354, %v1375
        %v1378 = vadd.f32 %v1355, %v1375
        %v1379 = vadd.f32 %v1356, %v1375
        %v1380 = vadd.f32 %v1357, %v1375
        %v1381 = vadd.f32 %v1358, %v1375
        %v1382 = vadd.f32 %v1359, %v1375
        %v1383 = vadd.f32 %v1360, %v1375
        %v1384 = vadd.f32 %v1361, %v1375
        %v1385 = vadd.f32 %v1362, %v1375
        %v1386 = vadd.f32 %v1363, %v1375
        %v1387 = vadd.f32 %v1364, %v1375
        %v1388 = vadd.f32 %v1365, %v1375
        %v1389 = vadd.f32 %v1366, %v1375
        %v1390 = vadd.f32 %v1367, %v1375
        %v1391 = vadd.f32 %v1368, %v1375
        %v1392 = vadd.f32 %v1369, %v1375
        %v1393 = vadd.f32 %v1019, %v1377
        %v1394 = vadd.f32 %v1020, %v1378
        %v1395 = vadd.f32 %v1021, %v1379
        %v1396 = vadd.f32 %v1022, %v1380
        %v1397 = vadd.f32 %v1023, %v1381
        %v1398 = vadd.f32 %v1024, %v1382
        %v1399 = vadd.f32 %v1025, %v1383
        %v1400 = vadd.f32 %v1026, %v1384
        %v1401 = vadd.f32 %v1027, %v1385
        %v1402 = vadd.f32 %v1028, %v1386
        %v1403 = vadd.f32 %v1029, %v1387
        %v1404 = vadd.f32 %v1030, %v1388
        %v1405 = vadd.f32 %v1031, %v1389
        %v1406 = vadd.f32 %v1032, %v1390
        %v1407 = vadd.f32 %v1033, %v1391
        %v1408 = vadd.f32 %v1034, %v1392
        %v1409 = vld [vmem:[#allocation8] sm:$0xff]
        %v1410 = vld [vmem:[#allocation8 + $0x8] sm:$0xff]
        %v1411 = vld [vmem:[#allocation8 + $0x10] sm:$0xff]
        %v1412 = vld [vmem:[#allocation8 + $0x18] sm:$0xff]
        %v1413 = vld [vmem:[#allocation8 + $0x20] sm:$0xff]
        %v1414 = vld [vmem:[#allocation8 + $0x28] sm:$0xff]
        %v1415 = vld [vmem:[#allocation8 + $0x30] sm:$0xff]
        %v1416 = vld [vmem:[#allocation8 + $0x38] sm:$0xff]
        %v1417 = vld [vmem:[#allocation8 + $0x40] sm:$0xff]
        %v1418 = vld [vmem:[#allocation8 + $0x48] sm:$0xff]
        %v1419 = vld [vmem:[#allocation8 + $0x50] sm:$0xff]
        %v1420 = vld [vmem:[#allocation8 + $0x58] sm:$0xff]
        %v1421 = vld [vmem:[#allocation8 + $0x60] sm:$0xff]
        %v1422 = vld [vmem:[#allocation8 + $0x68] sm:$0xff]
        %v1423 = vld [vmem:[#allocation8 + $0x70] sm:$0xff]
        %v1424 = vld [vmem:[#allocation8 + $0x78] sm:$0xff]
        %v1425 = vld [vmem:[%s10] sm:$0x1]
        %v1427 = vlaneseq
        %v1428 = vshrl.u32 %v1427, 7
        %v1429 = vsub.s32 0, %v1428
        %v1430 = vrot.slane %v1425, %v1429
        %1432 = vmatprep.subr.mxu0 0.0
        %1433 = vmatpush1.msra.mxu0 %v1409
        %1434 = vmatprep.subr.mxu0 0.0
        %1435 = vmatpush1.msra.mxu0 %v1410
        %1436 = vmatprep.subr.mxu0 0.0
        %1437 = vmatpush1.msra.mxu0 %v1411
        %1438 = vmatprep.subr.mxu0 0.0
        %1439 = vmatpush1.msra.mxu0 %v1412
        %1440 = vmatprep.subr.mxu0 0.0
        %1441 = vmatpush1.msra.mxu0 %v1413
        %1442 = vmatprep.subr.mxu0 0.0
        %1443 = vmatpush1.msra.mxu0 %v1414
        %1444 = vmatprep.subr.mxu0 0.0
        %1445 = vmatpush1.msra.mxu0 %v1415
        %1446 = vmatprep.subr.mxu0 0.0
        %1447 = vmatpush1.msra.mxu0 %v1416
        %1448 = vmatprep.subr.mxu0 0.0
        %1449 = vmatpush1.msra.mxu0 %v1417
        %1450 = vmatprep.subr.mxu0 0.0
        %1451 = vmatpush1.msra.mxu0 %v1418
        %1452 = vmatprep.subr.mxu0 0.0
        %1453 = vmatpush1.msra.mxu0 %v1419
        %1454 = vmatprep.subr.mxu0 0.0
        %1455 = vmatpush1.msra.mxu0 %v1420
        %1456 = vmatprep.subr.mxu0 0.0
        %1457 = vmatpush1.msra.mxu0 %v1421
        %1458 = vmatprep.subr.mxu0 0.0
        %1459 = vmatpush1.msra.mxu0 %v1422
        %1460 = vmatprep.subr.mxu0 0.0
        %1461 = vmatpush1.msra.mxu0 %v1423
        %1462 = vmatprep.subr.mxu0 0.0
        %1463 = vmatpush1.msra.mxu0 %v1424
        %1464 = vmatprep.subr.mxu0 0.0
        %1465 = vmatpush1.msra.mxu0 0.0
        %1466 = vmatprep.subr.mxu0 0.0
        %1467 = vmatpush1.msra.mxu0 0.0
        %1468 = vmatprep.subr.mxu0 0.0
        %1469 = vmatpush1.msra.mxu0 0.0
        %1470 = vmatprep.subr.mxu0 0.0
        %1471 = vmatpush1.msra.mxu0 0.0
        %1472 = vmatprep.subr.mxu0 0.0
        %1473 = vmatpush1.msra.mxu0 0.0
        %1474 = vmatprep.subr.mxu0 0.0
        %1475 = vmatpush1.msra.mxu0 0.0
        %1476 = vmatprep.subr.mxu0 0.0
        %1477 = vmatpush1.msra.mxu0 0.0
        %1478 = vmatprep.subr.mxu0 0.0
        %1479 = vmatpush1.msra.mxu0 0.0
        %1480 = vmatprep.subr.mxu0 0.0
        %1481 = vmatpush1.msra.mxu0 0.0
        %1482 = vmatprep.subr.mxu0 0.0
        %1483 = vmatpush1.msra.mxu0 0.0
        %1484 = vmatprep.subr.mxu0 0.0
        %1485 = vmatpush1.msra.mxu0 0.0
        %1486 = vmatprep.subr.mxu0 0.0
        %1487 = vmatpush1.msra.mxu0 0.0
        %1488 = vmatprep.subr.mxu0 0.0
        %1489 = vmatpush1.msra.mxu0 0.0
        %1490 = vmatprep.subr.mxu0 0.0
        %1491 = vmatpush1.msra.mxu0 0.0
        %1492 = vmatprep.subr.mxu0 0.0
        %1493 = vmatpush1.msra.mxu0 0.0
        %1494 = vmatprep.subr.mxu0 0.0
        %1495 = vmatpush1.msra.mxu0 0.0
        %1496 = vmatprep.mubr.f32.mxu0 0.0
        %1497 = vmatmul.mubr.f32.gmra.mrb[0].mxu0 %v1393
        %v1498 = vpop.f32.mrb[0].mxu0
        %v1499 = vadd.f32 %v1430, %v1498
        %v1500 = vpop.f32.mrb[0].mxu0
        %1501 = vmatprep.mubr.f32.mxu0 0.0
        %1502 = vmatmul.mubr.f32.gmra.mrb[0].mxu0 %v1394
        %v1503 = vpop.f32.mrb[0].mxu0
        %v1504 = vadd.f32 %v1430, %v1503
        %v1505 = vpop.f32.mrb[0].mxu0
        %1506 = vmatprep.mubr.f32.mxu0 0.0
        %1507 = vmatmul.mubr.f32.gmra.mrb[0].mxu0 %v1395
        %v1508 = vpop.f32.mrb[0].mxu0
        %v1509 = vadd.f32 %v1430, %v1508
        %v1510 = vpop.f32.mrb[0].mxu0
        %1511 = vmatprep.mubr.f32.mxu0 0.0
        %1512 = vmatmul.mubr.f32.gmra.mrb[0].mxu0 %v1396
        %v1513 = vpop.f32.mrb[0].mxu0
        %v1514 = vadd.f32 %v1430, %v1513
        %v1515 = vpop.f32.mrb[0].mxu0
        %1516 = vmatprep.mubr.f32.mxu0 0.0
        %1517 = vmatmul.mubr.f32.gmra.mrb[0].mxu0 %v1397
        %v1518 = vpop.f32.mrb[0].mxu0
        %v1519 = vadd.f32 %v1430, %v1518
        %v1520 = vpop.f32.mrb[0].mxu0
        %1521 = vmatprep.mubr.f32.mxu0 0.0
        %1522 = vmatmul.mubr.f32.gmra.mrb[0].mxu0 %v1398
        %v1523 = vpop.f32.mrb[0].mxu0
        %v1524 = vadd.f32 %v1430, %v1523
        %v1525 = vpop.f32.mrb[0].mxu0
        %1526 = vmatprep.mubr.f32.mxu0 0.0
        %1527 = vmatmul.mubr.f32.gmra.mrb[0].mxu0 %v1399
        %v1528 = vpop.f32.mrb[0].mxu0
        %v1529 = vadd.f32 %v1430, %v1528
        %v1530 = vpop.f32.mrb[0].mxu0
        %1531 = vmatprep.mubr.f32.mxu0 0.0
        %1532 = vmatmul.mubr.f32.gmra.mrb[0].mxu0 %v1400
        %v1533 = vpop.f32.mrb[0].mxu0
        %v1534 = vadd.f32 %v1430, %v1533
        %v1535 = vpop.f32.mrb[0].mxu0
        %1536 = vmatprep.mubr.f32.mxu0 0.0
        %1537 = vmatmul.mubr.f32.gmra.mrb[0].mxu0 %v1401
        %v1538 = vpop.f32.mrb[0].mxu0
        %v1539 = vadd.f32 %v1430, %v1538
        %v1540 = vpop.f32.mrb[0].mxu0
        %1541 = vmatprep.mubr.f32.mxu0 0.0
        %1542 = vmatmul.mubr.f32.gmra.mrb[0].mxu0 %v1402
        %v1543 = vpop.f32.mrb[0].mxu0
        %v1544 = vadd.f32 %v1430, %v1543
        %v1545 = vpop.f32.mrb[0].mxu0
        %1546 = vmatprep.mubr.f32.mxu0 0.0
        %1547 = vmatmul.mubr.f32.gmra.mrb[0].mxu0 %v1403
        %v1548 = vpop.f32.mrb[0].mxu0
        %v1549 = vadd.f32 %v1430, %v1548
        %v1550 = vpop.f32.mrb[0].mxu0
        %1551 = vmatprep.mubr.f32.mxu0 0.0
        %1552 = vmatmul.mubr.f32.gmra.mrb[0].mxu0 %v1404
        %v1553 = vpop.f32.mrb[0].mxu0
        %v1554 = vadd.f32 %v1430, %v1553
        %v1555 = vpop.f32.mrb[0].mxu0
        %1556 = vmatprep.mubr.f32.mxu0 0.0
        %1557 = vmatmul.mubr.f32.gmra.mrb[0].mxu0 %v1405
        %v1558 = vpop.f32.mrb[0].mxu0
        %v1559 = vadd.f32 %v1430, %v1558
        %v1560 = vpop.f32.mrb[0].mxu0
        %1561 = vmatprep.mubr.f32.mxu0 0.0
        %1562 = vmatmul.mubr.f32.gmra.mrb[0].mxu0 %v1406
        %v1563 = vpop.f32.mrb[0].mxu0
        %v1564 = vadd.f32 %v1430, %v1563
        %v1565 = vpop.f32.mrb[0].mxu0
        %1566 = vmatprep.mubr.f32.mxu0 0.0
        %1567 = vmatmul.mubr.f32.gmra.mrb[0].mxu0 %v1407
        %v1568 = vpop.f32.mrb[0].mxu0
        %v1569 = vadd.f32 %v1430, %v1568
        %v1570 = vpop.f32.mrb[0].mxu0
        %1571 = vmatprep.mubr.f32.mxu0 0.0
        %1572 = vmatmul.mubr.f32.gmra.mrb[0].mxu0 %v1408
        %v1573 = vpop.f32.mrb[0].mxu0
        %v1574 = vadd.f32 %v1430, %v1573
        %v1575 = vpop.f32.mrb[0].mxu0
        %1576 = vdwg.mxu0
        %v1577 = vmul.f32 %v1499, 0.5
        %v1578 = vmul.f32 %v1504, 0.5
        %v1579 = vmul.f32 %v1509, 0.5
        %v1580 = vmul.f32 %v1514, 0.5
        %v1581 = vmul.f32 %v1519, 0.5
        %v1582 = vmul.f32 %v1524, 0.5
        %v1583 = vmul.f32 %v1529, 0.5
        %v1584 = vmul.f32 %v1534, 0.5
        %v1585 = vmul.f32 %v1539, 0.5
        %v1586 = vmul.f32 %v1544, 0.5
        %v1587 = vmul.f32 %v1549, 0.5
        %v1588 = vmul.f32 %v1554, 0.5
        %v1589 = vmul.f32 %v1559, 0.5
        %v1590 = vmul.f32 %v1564, 0.5
        %v1591 = vmul.f32 %v1569, 0.5
        %v1592 = vmul.f32 %v1574, 0.5
        %v1593 = vmul.f32 %v1499, 0.044715
        %v1594 = vmul.f32 %v1504, 0.044715
        %v1595 = vmul.f32 %v1509, 0.044715
        %v1596 = vmul.f32 %v1514, 0.044715
        %v1597 = vmul.f32 %v1519, 0.044715
        %v1598 = vmul.f32 %v1524, 0.044715
        %v1599 = vmul.f32 %v1529, 0.044715
        %v1600 = vmul.f32 %v1534, 0.044715
        %v1601 = vmul.f32 %v1539, 0.044715
        %v1602 = vmul.f32 %v1544, 0.044715
        %v1603 = vmul.f32 %v1549, 0.044715
        %v1604 = vmul.f32 %v1554, 0.044715
        %v1605 = vmul.f32 %v1559, 0.044715
        %v1606 = vmul.f32 %v1564, 0.044715
        %v1607 = vmul.f32 %v1569, 0.044715
        %v1608 = vmul.f32 %v1574, 0.044715
        %v1609 = vmul.f32 %v1593, %v1499
        %v1610 = vmul.f32 %v1594, %v1504
        %v1611 = vmul.f32 %v1595, %v1509
        %v1612 = vmul.f32 %v1596, %v1514
        %v1613 = vmul.f32 %v1597, %v1519
        %v1614 = vmul.f32 %v1598, %v1524
        %v1615 = vmul.f32 %v1599, %v1529
        %v1616 = vmul.f32 %v1600, %v1534
        %v1617 = vmul.f32 %v1601, %v1539
        %v1618 = vmul.f32 %v1602, %v1544
        %v1619 = vmul.f32 %v1603, %v1549
        %v1620 = vmul.f32 %v1604, %v1554
        %v1621 = vmul.f32 %v1605, %v1559
        %v1622 = vmul.f32 %v1606, %v1564
        %v1623 = vmul.f32 %v1607, %v1569
        %v1624 = vmul.f32 %v1608, %v1574
        %v1625 = vmul.f32 %v1609, %v1499
        %v1626 = vmul.f32 %v1610, %v1504
        %v1627 = vmul.f32 %v1611, %v1509
        %v1628 = vmul.f32 %v1612, %v1514
        %v1629 = vmul.f32 %v1613, %v1519
        %v1630 = vmul.f32 %v1614, %v1524
        %v1631 = vmul.f32 %v1615, %v1529
        %v1632 = vmul.f32 %v1616, %v1534
        %v1633 = vmul.f32 %v1617, %v1539
        %v1634 = vmul.f32 %v1618, %v1544
        %v1635 = vmul.f32 %v1619, %v1549
        %v1636 = vmul.f32 %v1620, %v1554
        %v1637 = vmul.f32 %v1621, %v1559
        %v1638 = vmul.f32 %v1622, %v1564
        %v1639 = vmul.f32 %v1623, %v1569
        %v1640 = vmul.f32 %v1624, %v1574
        %v1641 = vadd.f32 %v1499, %v1625
        %v1642 = vadd.f32 %v1504, %v1626
        %v1643 = vadd.f32 %v1509, %v1627
        %v1644 = vadd.f32 %v1514, %v1628
        %v1645 = vadd.f32 %v1519, %v1629
        %v1646 = vadd.f32 %v1524, %v1630
        %v1647 = vadd.f32 %v1529, %v1631
        %v1648 = vadd.f32 %v1534, %v1632
        %v1649 = vadd.f32 %v1539, %v1633
        %v1650 = vadd.f32 %v1544, %v1634
        %v1651 = vadd.f32 %v1549, %v1635
        %v1652 = vadd.f32 %v1554, %v1636
        %v1653 = vadd.f32 %v1559, %v1637
        %v1654 = vadd.f32 %v1564, %v1638
        %v1655 = vadd.f32 %v1569, %v1639
        %v1656 = vadd.f32 %v1574, %v1640
        %v1657 = vmul.f32 %v1641, 0.7978846
        %v1658 = vmul.f32 %v1642, 0.7978846
        %v1659 = vmul.f32 %v1643, 0.7978846
        %v1660 = vmul.f32 %v1644, 0.7978846
        %v1661 = vmul.f32 %v1645, 0.7978846
        %v1662 = vmul.f32 %v1646, 0.7978846
        %v1663 = vmul.f32 %v1647, 0.7978846
        %v1664 = vmul.f32 %v1648, 0.7978846
        %v1665 = vmul.f32 %v1649, 0.7978846
        %v1666 = vmul.f32 %v1650, 0.7978846
        %v1667 = vmul.f32 %v1651, 0.7978846
        %v1668 = vmul.f32 %v1652, 0.7978846
        %v1669 = vmul.f32 %v1653, 0.7978846
        %v1670 = vmul.f32 %v1654, 0.7978846
        %v1671 = vmul.f32 %v1655, 0.7978846
        %v1672 = vmul.f32 %v1656, 0.7978846
        %v1673 = vtanh.pop %v1657
        %v1674 = vtanh.pop %v1658
        %v1675 = vtanh.pop %v1659
        %v1676 = vtanh.pop %v1660
        %v1677 = vtanh.pop %v1661
        %v1678 = vtanh.pop %v1662
        %v1679 = vtanh.pop %v1663
        %v1680 = vtanh.pop %v1664
        %v1681 = vtanh.pop %v1665
        %v1682 = vtanh.pop %v1666
        %v1683 = vtanh.pop %v1667
        %v1684 = vtanh.pop %v1668
        %v1685 = vtanh.pop %v1669
        %v1686 = vtanh.pop %v1670
        %v1687 = vtanh.pop %v1671
        %v1688 = vtanh.pop %v1672
        %v1689 = vadd.f32 %v1673, 1.0
        %v1690 = vadd.f32 %v1674, 1.0
        %v1691 = vadd.f32 %v1675, 1.0
        %v1692 = vadd.f32 %v1676, 1.0
        %v1693 = vadd.f32 %v1677, 1.0
        %v1694 = vadd.f32 %v1678, 1.0
        %v1695 = vadd.f32 %v1679, 1.0
        %v1696 = vadd.f32 %v1680, 1.0
        %v1697 = vadd.f32 %v1681, 1.0
        %v1698 = vadd.f32 %v1682, 1.0
        %v1699 = vadd.f32 %v1683, 1.0
        %v1700 = vadd.f32 %v1684, 1.0
        %v1701 = vadd.f32 %v1685, 1.0
        %v1702 = vadd.f32 %v1686, 1.0
        %v1703 = vadd.f32 %v1687, 1.0
        %v1704 = vadd.f32 %v1688, 1.0
        %v1705 = vmul.f32 %v1577, %v1689
        %v1706 = vmul.f32 %v1578, %v1690
        %v1707 = vmul.f32 %v1579, %v1691
        %v1708 = vmul.f32 %v1580, %v1692
        %v1709 = vmul.f32 %v1581, %v1693
        %v1710 = vmul.f32 %v1582, %v1694
        %v1711 = vmul.f32 %v1583, %v1695
        %v1712 = vmul.f32 %v1584, %v1696
        %v1713 = vmul.f32 %v1585, %v1697
        %v1714 = vmul.f32 %v1586, %v1698
        %v1715 = vmul.f32 %v1587, %v1699
        %v1716 = vmul.f32 %v1588, %v1700
        %v1717 = vmul.f32 %v1589, %v1701
        %v1718 = vmul.f32 %v1590, %v1702
        %v1719 = vmul.f32 %v1591, %v1703
        %v1720 = vmul.f32 %v1592, %v1704
        %1721 = vst [vmem:[%s449] sm:$0xff] %v1705
        %1722 = vst [vmem:[%s449 + $0x8] sm:$0xff] %v1706
        %1723 = vst [vmem:[%s449 + $0x10] sm:$0xff] %v1707
        %1724 = vst [vmem:[%s449 + $0x18] sm:$0xff] %v1708
        %1725 = vst [vmem:[%s449 + $0x20] sm:$0xff] %v1709
        %1726 = vst [vmem:[%s449 + $0x28] sm:$0xff] %v1710
        %1727 = vst [vmem:[%s449 + $0x30] sm:$0xff] %v1711
        %1728 = vst [vmem:[%s449 + $0x38] sm:$0xff] %v1712
        %1729 = vst [vmem:[%s449 + $0x40] sm:$0xff] %v1713
        %1730 = vst [vmem:[%s449 + $0x48] sm:$0xff] %v1714
        %1731 = vst [vmem:[%s449 + $0x50] sm:$0xff] %v1715
        %1732 = vst [vmem:[%s449 + $0x58] sm:$0xff] %v1716
        %1733 = vst [vmem:[%s449 + $0x60] sm:$0xff] %v1717
        %1734 = vst [vmem:[%s449 + $0x68] sm:$0xff] %v1718
        %1735 = vst [vmem:[%s449 + $0x70] sm:$0xff] %v1719
        %1736 = vst [vmem:[%s449 + $0x78] sm:$0xff] %v1720
        %s1737 = sand.u32 %s274, 1
        %s1738 = scalar_lea.sflag [#allocation4], %s1737
        %s1739 = sand.u32 %s274, 1
        %s1740 = smul.addr %s1739, 128
        %s1741 = scalar_lea.vmem [#allocation10], %s1740
        // Predicated region
        $region81: #{tpu_custom_call.1} parent=63 // pred_check
          %p1742 = pneg %p284
        $region82: #{tpu_custom_call.1} parent=63 // pred_check_branch
          %1744 = sbr.rel (%p1742) target = $region84
        $region83: #{tpu_custom_call.1} parent=63 // pred_region
          %s1745 = smul.u32 16, %s30
          %s1747 = ssub.s32 2048, 2048
          %1748 = vsyncadd %s1738, %s1747
          %s1749 = smul.addr %s1745, 128
          %s1750 = scalar_lea.hbm %s11, %s1749
          %s1751 = sshll.u32 %s1741, 4
          %s1752 = int_to_ptr.vmem [resolvable:$true] %s1751
          %1757 = dma.vmem_to_hbm [thread:$0]  %s1752, 2048, %s1750, %s1738, 128, 128, 8
        $region84: #{tpu_custom_call.1} parent=63 // pred_fallthru
          _
      $region64: #{tpu_custom_call.1} parent=5 // pred_fallthru
        _
      %p1758 = scmp.le.s32.totalorder 2, %s25
      // Predicated region
      $region85: #{tpu_custom_call.1} parent=5 // pred_check
        %p1759 = pneg %p1758
      $region86: #{tpu_custom_call.1} parent=5 // pred_check_branch
        %1761 = sbr.rel (%p1759) target = $region88
      $region87: #{tpu_custom_call.1} parent=5 // pred_region
        %s1762 = ssub.s32 %s25, 2
        // Predicated region
        $region89: #{tpu_custom_call.1} parent=87 // pred_check
          %p1763 = pneg %p290
        $region90: #{tpu_custom_call.1} parent=87 // pred_check_branch
          %1765 = sbr.rel (%p1763) target = $region92
        $region91: #{tpu_custom_call.1} parent=87 // pred_region
          %s1766 = sand.u32 %s275, 1
          %s1767 = scalar_lea.sflag [#allocation4], %s1766
          %s1768 = sand.u32 %s275, 1
          %s1769 = smul.addr %s1768, 128
          %s1770 = scalar_lea.vmem [#allocation10], %s1769
          %1771 = dma.done %s1767, 2048
        $region92: #{tpu_custom_call.1} parent=87 // pred_fallthru
          _
      $region88: #{tpu_custom_call.1} parent=5 // pred_fallthru
        _
    $region6: #{tpu_custom_call.1} parent=1 // loop_footer
      %s29 = sadd.s32 1, %s25
    $region7: #{tpu_custom_call.1} parent=1 // loop_footer_branch
      %24 = sbr.rel target = $region3
    $region8: #{tpu_custom_call.1} parent=1 // loop_exit
      _
    %1772 = vsyncpa [#allocation3], 1
    %s1773 = scalar_lea.sflag [#allocation3], 1
    %1774 = vsyncpa %s1773, 1
    %1775 = vsyncpa [#allocation6], 1
    %1776 = vsyncpa [#allocation9], 1
    %1777 = vsyncpa [#allocation4], 1
    %s1778 = scalar_lea.sflag [#allocation4], 1
    %1779 = vsyncpa %s1778, 1

</llo_original>
